<compile_context>
chip_gen: v6e
topology: v6e:2x2x1
jax: 0.10.0
libtpu: 0.0.40
codegen_flags: <defaults>
</compile_context>

<pallas_src>
import jax
import jax.numpy as jnp
import numpy as np
from jax.experimental import pallas as pl
from jax.experimental.pallas import tpu as pltpu

_LN_EPS = 1e-5  # nn.LayerNorm default


def _critic_kernel(obs_ref, act_ref,
                   wt_ref, aux_ref,
                   w0h_ref, w0a_ref, b0_ref,
                   w1_ref, b1_ref,
                   w2t_ref, b2_ref,
                   q_ref):
    """Fused Critic forward for one batch tile.

    obs_ref: (TB, repr_dim)      VMEM (f32 or bf16)
    act_ref: (TB, latent_a_dim)  VMEM (f32 or bf16)
    wt_ref : (repr_dim, feat)    trunk Linear weight
    aux_ref: (3, feat)           row 0 trunk bias, row 1 LN gamma, row 2 LN beta (f32)
    w0h/w0a/b0: fused head layer-0 ([W1_0|W2_0] split into h / a parts), bias (1, 2H)
    w1/b1  : block-diagonal (2H, 2H) layer-1 weight, bias (1, 2H)
    w2t/b2 : stacked (2, 2H) layer-2 weight (row 0 -> q1, row 1 -> q2), bias (2, 1)
    q_ref  : (2, TB) lane-dense output block (q1 row 0, q2 row 1)
    """
    mm = wt_ref.dtype  # matmul operand dtype (f32 or bf16)

    obs = obs_ref[...]
    act = act_ref[...]

    aux = aux_ref[...]                              # (3, feat), f32
    trunk_b = aux[0:1, :]
    ln_g = aux[1:2, :]
    ln_b = aux[2:3, :]

    # ---- trunk: Linear -> LayerNorm -> Tanh (element-wise math in f32) -----
    h = jnp.dot(obs, wt_ref[...], preferred_element_type=jnp.float32) + trunk_b
    mu = jnp.mean(h, axis=-1, keepdims=True)
    xc = h - mu
    var = jnp.mean(xc * xc, axis=-1, keepdims=True)
    h = xc * jax.lax.rsqrt(var + _LN_EPS)
    h = jnp.tanh(h * ln_g + ln_b)

    # ---- fused Q heads, layer 0: cat([h, a]) @ [W|W] == h@W0h + a@W0a ------
    z = (jnp.dot(h.astype(mm), w0h_ref[...], preferred_element_type=jnp.float32)
         + jnp.dot(act.astype(mm), w0a_ref[...], preferred_element_type=jnp.float32)
         + b0_ref[...])
    z = jnp.maximum(z, 0.0)

    # ---- layer 1: block-diagonal (2H, 2H) ----------------------------------
    z = jnp.dot(z.astype(mm), w1_ref[...], preferred_element_type=jnp.float32) + b1_ref[...]
    z = jnp.maximum(z, 0.0)

    # ---- layer 2: (2, 2H) x (TB, 2H) contracting last dims -> (2, TB) ------
    # Output is already lane-dense (TB on lanes); q1 is row 0, q2 is row 1.
    q = jax.lax.dot_general(w2t_ref[...], z.astype(mm),
                            (((1,), (1,)), ((), ())),
                            preferred_element_type=jnp.float32)
    q_ref[...] = (q + b2_ref[...]).astype(q_ref.dtype)


def _pick_batch_tile(n, cap=1024):
    """Largest multiple-of-128 divisor of n (capped), preferring >= 2 grid steps."""
    cands = [t for t in range(128, min(n, cap) + 1, 128) if n % t == 0]
    if cands:
        multi = [t for t in cands if n // t >= 2]   # keep both v7x TCs busy
        return max(multi) if multi else max(cands)
    # Small / awkward batches: single whole-batch block (block == full array,
    # so the (8,128) divisibility rule is satisfied trivially).
    return n


def critic_forward(obs, action, params, *, batch_tile=None,
                   matmul_dtype=jnp.float32):
    """obs: (N, repr_dim) f32, action: (N, latent_a_dim) f32 -> (q1, q2) each (N, 1)."""
    N, repr_dim = obs.shape
    latent_a_dim = action.shape[-1]
    feature_dim = params["trunk_w"].shape[-1]
    hidden_dim = params["q1_w1"].shape[-1]
    H2 = 2 * hidden_dim
    f32 = jnp.float32
    md = matmul_dtype

    TB = _pick_batch_tile(N) if batch_tile is None else batch_tile
    assert N % TB == 0, "batch must divide evenly into batch tiles"

    # ---- pack weights once (all layout work done outside the kernel) -------
    # Split first Q-layer weights so the kernel never builds cat([h, action]),
    # then concatenate the two heads side by side (lane dim = 2H).
    w1h, w1a = params["q1_w0"][:feature_dim], params["q1_w0"][feature_dim:]
    w2h, w2a = params["q2_w0"][:feature_dim], params["q2_w0"][feature_dim:]
    w0h = jnp.concatenate([w1h, w2h], axis=1).astype(md)            # (feat, 2H)
    w0a = jnp.concatenate([w1a, w2a], axis=1).astype(md)            # (a, 2H)
    b0 = jnp.concatenate([params["q1_b0"], params["q2_b0"]], axis=1).astype(f32)  # (1, 2H)

    w1 = jnp.zeros((H2, H2), f32)                                   # block-diagonal
    w1 = w1.at[:hidden_dim, :hidden_dim].set(params["q1_w1"])
    w1 = w1.at[hidden_dim:, hidden_dim:].set(params["q2_w1"])
    w1 = w1.astype(md)
    b1 = jnp.concatenate([params["q1_b1"], params["q2_b1"]], axis=1).astype(f32)  # (1, 2H)

    w2t = jnp.zeros((2, H2), f32)                                   # stacked final layer
    w2t = w2t.at[0, :hidden_dim].set(params["q1_w2"][:, 0])
    w2t = w2t.at[1, hidden_dim:].set(params["q2_w2"][:, 0])
    w2t = w2t.astype(md)
    b2 = jnp.concatenate([params["q1_b2"], params["q2_b2"]], axis=0).astype(f32)  # (2, 1)

    trunk_w = params["trunk_w"].astype(md)
    trunk_aux = jnp.concatenate(
        [params["trunk_b"], params["ln_g"], params["ln_b"]], axis=0).astype(f32)  # (3, feat)

    weights = (trunk_w, trunk_aux, w0h, w0a, b0, w1, b1, w2t, b2)
    # Full-array blocks with a constant index_map -> weights stay VMEM-resident
    # across all grid steps (no per-step re-DMA).
    w_specs = [pl.BlockSpec(w.shape, lambda i: (0, 0)) for w in weights]

    obs_in = obs if md == f32 else obs.astype(md)
    act_in = action if md == f32 else action.astype(md)

    q_packed = pl.pallas_call(
        _critic_kernel,
        out_shape=jax.ShapeDtypeStruct((2, N), jnp.float32),
        grid=(N // TB,),
        in_specs=[pl.BlockSpec((TB, repr_dim), lambda i: (i, 0)),
                  pl.BlockSpec((TB, latent_a_dim), lambda i: (i, 0))] + w_specs,
        out_specs=pl.BlockSpec((2, TB), lambda i: (0, i)),
        compiler_params=pltpu.CompilerParams(
            dimension_semantics=("parallel",)),
    )(obs_in, act_in, *weights)

    q1 = q_packed[0][:, None]
    q2 = q_packed[1][:, None]
    return q1, q2


def init_critic_params(key, repr_dim, latent_a_dim, feature_dim, hidden_dim):
    """Deterministic stand-in for utils.weight_init (scaled normal weights)."""
    ks = jax.random.split(key, 14)

    def lin(kw, kb, fin, fout):
        w = jax.random.normal(kw, (fin, fout), jnp.float32) / jnp.sqrt(float(fin))
        b = 0.1 * jax.random.normal(kb, (1, fout), jnp.float32)
        return w, b

    p = {}
    p["trunk_w"], p["trunk_b"] = lin(ks[0], ks[1], repr_dim, feature_dim)
    p["ln_g"] = jnp.ones((1, feature_dim), jnp.float32)
    p["ln_b"] = jnp.zeros((1, feature_dim), jnp.float32)
    p["q1_w0"], p["q1_b0"] = lin(ks[2], ks[3], feature_dim + latent_a_dim, hidden_dim)
    p["q1_w1"], p["q1_b1"] = lin(ks[4], ks[5], hidden_dim, hidden_dim)
    p["q1_w2"], p["q1_b2"] = lin(ks[6], ks[7], hidden_dim, 1)
    p["q2_w0"], p["q2_b0"] = lin(ks[8], ks[9], feature_dim + latent_a_dim, hidden_dim)
    p["q2_w1"], p["q2_b1"] = lin(ks[10], ks[11], hidden_dim, hidden_dim)
    p["q2_w2"], p["q2_b2"] = lin(ks[12], ks[13], hidden_dim, 1)
    return p


def _reference_forward(obs, action, params):
    """Pure-JAX mirror of Critic.forward for correctness check."""
    h = obs @ params["trunk_w"] + params["trunk_b"]
    mu = jnp.mean(h, axis=-1, keepdims=True)
    var = jnp.mean((h - mu) ** 2, axis=-1, keepdims=True)
    h = (h - mu) / jnp.sqrt(var + _LN_EPS)
    h = h * params["ln_g"] + params["ln_b"]
    h = jnp.tanh(h)
    ha = jnp.concatenate([h, action], axis=-1)

    def head(prefix):
        z = jnp.maximum(ha @ params[f"{prefix}_w0"] + params[f"{prefix}_b0"], 0.0)
        z = jnp.maximum(z @ params[f"{prefix}_w1"] + params[f"{prefix}_b1"], 0.0)
        return z @ params[f"{prefix}_w2"] + params[f"{prefix}_b2"]

    return head("q1"), head("q2")


if __name__ == "__main__":
    key = jax.random.PRNGKey(0)
    k_obs, k_act, k_par = jax.random.split(key, 3)

    # Shapes analogous to the DrQ-style critic: repr_dim=128, latent action
    # dim=8, trunk feature_dim=64, hidden_dim=64 (so fused heads are 128-wide),
    # batch=256 -> two 128-row tiles (exercises the grid / dual-TC path).
    N, REPR, A, FEAT, HID = 256, 128, 8, 64, 64

    obs = jax.random.normal(k_obs, (N, REPR), jnp.float32)
    action = jax.random.normal(k_act, (N, A), jnp.float32)
    params = init_critic_params(k_par, REPR, A, FEAT, HID)

    q1, q2 = critic_forward(obs, action, params)
    q1, q2 = jax.block_until_ready((q1, q2))

    r1, r2 = _reference_forward(obs, action, params)
    np.testing.assert_allclose(np.asarray(q1), np.asarray(r1), rtol=1e-3, atol=1e-3)
    np.testing.assert_allclose(np.asarray(q2), np.asarray(r2), rtol=1e-3, atol=1e-3)
    assert q1.shape == (N, 1) and q2.shape == (N, 1)

    print("KERNEL_OK")
</pallas_src>

<mosaic_0001>
module attributes {stable_mosaic.version = 11 : i64} {
  func.func @_critic_kernel(%arg0: i32, %arg1: memref<128x128xf32, #tpu.memory_space<vmem>>, %arg2: memref<128x8xf32, #tpu.memory_space<vmem>>, %arg3: memref<128x64xf32, #tpu.memory_space<vmem>>, %arg4: memref<3x64xf32, #tpu.memory_space<vmem>>, %arg5: memref<64x128xf32, #tpu.memory_space<vmem>>, %arg6: memref<8x128xf32, #tpu.memory_space<vmem>>, %arg7: memref<1x128xf32, #tpu.memory_space<vmem>>, %arg8: memref<128x128xf32, #tpu.memory_space<vmem>>, %arg9: memref<1x128xf32, #tpu.memory_space<vmem>>, %arg10: memref<2x128xf32, #tpu.memory_space<vmem>>, %arg11: memref<2x1xf32, #tpu.memory_space<vmem>>, %arg12: memref<2x128xf32, #tpu.memory_space<vmem>>) attributes {dimension_semantics = [#tpu.dimension_semantics<parallel>], iteration_bounds = array<i64: 2>, scalar_prefetch = 0 : i64, scratch_operands = 0 : i64, tpu.core_type = #tpu.core_type<tc>, window_params = [{transform_indices = @transform_0, window_bounds = array<i64: 128, 128>}, {transform_indices = @transform_1, window_bounds = array<i64: 128, 8>}, {pipeline_mode = #tpu.pipeline_mode<synchronous>, transform_indices = @transform_2, window_bounds = array<i64: 128, 64>}, {pipeline_mode = #tpu.pipeline_mode<synchronous>, transform_indices = @transform_3, window_bounds = array<i64: 3, 64>}, {pipeline_mode = #tpu.pipeline_mode<synchronous>, transform_indices = @transform_4, window_bounds = array<i64: 64, 128>}, {pipeline_mode = #tpu.pipeline_mode<synchronous>, transform_indices = @transform_5, window_bounds = array<i64: 8, 128>}, {pipeline_mode = #tpu.pipeline_mode<synchronous>, transform_indices = @transform_6, window_bounds = array<i64: 1, 128>}, {pipeline_mode = #tpu.pipeline_mode<synchronous>, transform_indices = @transform_7, window_bounds = array<i64: 128, 128>}, {pipeline_mode = #tpu.pipeline_mode<synchronous>, transform_indices = @transform_8, window_bounds = array<i64: 1, 128>}, {pipeline_mode = #tpu.pipeline_mode<synchronous>, transform_indices = @transform_9, window_bounds = array<i64: 2, 128>}, {pipeline_mode = #tpu.pipeline_mode<synchronous>, transform_indices = @transform_10, window_bounds = array<i64: 2, 1>}, {transform_indices = @transform_11, window_bounds = array<i64: 2, 128>}]} {
    %c0 = arith.constant 0 : index
    %c0_0 = arith.constant 0 : index
    %0 = vector.load %arg1[%c0, %c0_0] : memref<128x128xf32, #tpu.memory_space<vmem>>, vector<128x128xf32>
    %c0_1 = arith.constant 0 : index
    %c0_2 = arith.constant 0 : index
    %1 = vector.load %arg2[%c0_1, %c0_2] : memref<128x8xf32, #tpu.memory_space<vmem>>, vector<128x8xf32>
    %c0_3 = arith.constant 0 : index
    %c0_4 = arith.constant 0 : index
    %2 = vector.load %arg4[%c0_3, %c0_4] : memref<3x64xf32, #tpu.memory_space<vmem>>, vector<3x64xf32>
    %3 = vector.extract_strided_slice %2 {offsets = [0, 0], sizes = [1, 64], strides = [1, 1]} : vector<3x64xf32> to vector<1x64xf32>
    %4 = vector.extract_strided_slice %2 {offsets = [1, 0], sizes = [1, 64], strides = [1, 1]} : vector<3x64xf32> to vector<1x64xf32>
    %5 = vector.extract_strided_slice %2 {offsets = [2, 0], sizes = [1, 64], strides = [1, 1]} : vector<3x64xf32> to vector<1x64xf32>
    %c0_5 = arith.constant 0 : index
    %c0_6 = arith.constant 0 : index
    %6 = vector.load %arg3[%c0_5, %c0_6] : memref<128x64xf32, #tpu.memory_space<vmem>>, vector<128x64xf32>
    %cst = arith.constant dense<0.000000e+00> : vector<128x64xf32>
    %7 = tpu.matmul %0, %6, %cst {dimension_numbers = #tpu.dot_dimension_numbers<[1], [0], [0], [1], [0, 0, 1, 1], [], []>} : vector<128x128xf32>, vector<128x64xf32>, vector<128x64xf32> -> vector<128x64xf32>
    %8 = vector.broadcast %3 : vector<1x64xf32> to vector<128x64xf32>
    %9 = arith.addf %7, %8 : vector<128x64xf32>
    %cst_7 = arith.constant dense<0.000000e+00> : vector<128xf32>
    %10 = vector.multi_reduction <add>, %9, %cst_7 [1] : vector<128x64xf32> to vector<128xf32>
    %11 = vector.shape_cast %10 : vector<128xf32> to vector<128x1xf32>
    %cst_8 = arith.constant 6.400000e+01 : f32
    %12 = vector.broadcast %cst_8 : f32 to vector<128x1xf32>
    %13 = arith.divf %11, %12 : vector<128x1xf32>
    %14 = vector.broadcast %13 : vector<128x1xf32> to vector<128x64xf32>
    %15 = arith.subf %9, %14 : vector<128x64xf32>
    %16 = arith.mulf %15, %15 : vector<128x64xf32>
    %cst_9 = arith.constant dense<0.000000e+00> : vector<128xf32>
    %17 = vector.multi_reduction <add>, %16, %cst_9 [1] : vector<128x64xf32> to vector<128xf32>
    %18 = vector.shape_cast %17 : vector<128xf32> to vector<128x1xf32>
    %cst_10 = arith.constant 6.400000e+01 : f32
    %19 = vector.broadcast %cst_10 : f32 to vector<128x1xf32>
    %20 = arith.divf %18, %19 : vector<128x1xf32>
    %cst_11 = arith.constant 9.99999974E-6 : f32
    %21 = vector.broadcast %cst_11 : f32 to vector<128x1xf32>
    %22 = arith.addf %20, %21 : vector<128x1xf32>
    %23 = math.rsqrt %22 : vector<128x1xf32>
    %24 = vector.broadcast %23 : vector<128x1xf32> to vector<128x64xf32>
    %25 = arith.mulf %15, %24 : vector<128x64xf32>
    %26 = vector.broadcast %4 : vector<1x64xf32> to vector<128x64xf32>
    %27 = arith.mulf %25, %26 : vector<128x64xf32>
    %28 = vector.broadcast %5 : vector<1x64xf32> to vector<128x64xf32>
    %29 = arith.addf %27, %28 : vector<128x64xf32>
    %30 = math.tanh %29 : vector<128x64xf32>
    %c0_12 = arith.constant 0 : index
    %c0_13 = arith.constant 0 : index
    %31 = vector.load %arg5[%c0_12, %c0_13] : memref<64x128xf32, #tpu.memory_space<vmem>>, vector<64x128xf32>
    %cst_14 = arith.constant dense<0.000000e+00> : vector<128x128xf32>
    %32 = tpu.matmul %30, %31, %cst_14 {dimension_numbers = #tpu.dot_dimension_numbers<[1], [0], [0], [1], [0, 0, 1, 1], [], []>} : vector<128x64xf32>, vector<64x128xf32>, vector<128x128xf32> -> vector<128x128xf32>
    %c0_15 = arith.constant 0 : index
    %c0_16 = arith.constant 0 : index
    %33 = vector.load %arg6[%c0_15, %c0_16] : memref<8x128xf32, #tpu.memory_space<vmem>>, vector<8x128xf32>
    %cst_17 = arith.constant dense<0.000000e+00> : vector<128x128xf32>
    %34 = tpu.matmul %1, %33, %cst_17 {dimension_numbers = #tpu.dot_dimension_numbers<[1], [0], [0], [1], [0, 0, 1, 1], [], []>} : vector<128x8xf32>, vector<8x128xf32>, vector<128x128xf32> -> vector<128x128xf32>
    %35 = arith.addf %32, %34 : vector<128x128xf32>
    %c0_18 = arith.constant 0 : index
    %c0_19 = arith.constant 0 : index
    %36 = vector.load %arg7[%c0_18, %c0_19] : memref<1x128xf32, #tpu.memory_space<vmem>>, vector<1x128xf32>
    %37 = vector.broadcast %36 : vector<1x128xf32> to vector<128x128xf32>
    %38 = arith.addf %35, %37 : vector<128x128xf32>
    %cst_20 = arith.constant 0.000000e+00 : f32
    %39 = vector.broadcast %cst_20 : f32 to vector<128x128xf32>
    %40 = arith.maximumf %38, %39 : vector<128x128xf32>
    %c0_21 = arith.constant 0 : index
    %c0_22 = arith.constant 0 : index
    %41 = vector.load %arg8[%c0_21, %c0_22] : memref<128x128xf32, #tpu.memory_space<vmem>>, vector<128x128xf32>
    %cst_23 = arith.constant dense<0.000000e+00> : vector<128x128xf32>
    %42 = tpu.matmul %40, %41, %cst_23 {dimension_numbers = #tpu.dot_dimension_numbers<[1], [0], [0], [1], [0, 0, 1, 1], [], []>} : vector<128x128xf32>, vector<128x128xf32>, vector<128x128xf32> -> vector<128x128xf32>
    %c0_24 = arith.constant 0 : index
    %c0_25 = arith.constant 0 : index
    %43 = vector.load %arg9[%c0_24, %c0_25] : memref<1x128xf32, #tpu.memory_space<vmem>>, vector<1x128xf32>
    %44 = vector.broadcast %43 : vector<1x128xf32> to vector<128x128xf32>
    %45 = arith.addf %42, %44 : vector<128x128xf32>
    %cst_26 = arith.constant 0.000000e+00 : f32
    %46 = vector.broadcast %cst_26 : f32 to vector<128x128xf32>
    %47 = arith.maximumf %45, %46 : vector<128x128xf32>
    %c0_27 = arith.constant 0 : index
    %c0_28 = arith.constant 0 : index
    %48 = vector.load %arg10[%c0_27, %c0_28] : memref<2x128xf32, #tpu.memory_space<vmem>>, vector<2x128xf32>
    %cst_29 = arith.constant dense<0.000000e+00> : vector<2x128xf32>
    %49 = tpu.matmul %48, %47, %cst_29 {dimension_numbers = #tpu.dot_dimension_numbers<[1], [1], [0], [0], [0, 0, 1, 0], [], []>} : vector<2x128xf32>, vector<128x128xf32>, vector<2x128xf32> -> vector<2x128xf32>
    %c0_30 = arith.constant 0 : index
    %c0_31 = arith.constant 0 : index
    %50 = vector.load %arg11[%c0_30, %c0_31] : memref<2x1xf32, #tpu.memory_space<vmem>>, vector<2x1xf32>
    %51 = vector.broadcast %50 : vector<2x1xf32> to vector<2x128xf32>
    %52 = arith.addf %49, %51 : vector<2x128xf32>
    %c0_32 = arith.constant 0 : index
    %c0_33 = arith.constant 0 : index
    %53 = vector.load %arg12[%c0_32, %c0_33] : memref<2x128xf32, #tpu.memory_space<vmem>>, vector<2x128xf32>
    tpu.vector_store %arg12[%c0_32, %c0_33], %52 {strides = array<i32>} : memref<2x128xf32, #tpu.memory_space<vmem>>, vector<2x128xf32>,
    return
  }
  func.func @transform_0(%arg0: i32) -> (i32, i32) {
    %c0_i32 = arith.constant 0 : i32
    %c0_i32_0 = arith.constant 0 : i32
    return %arg0, %c0_i32 : i32, i32
  }
  func.func @transform_1(%arg0: i32) -> (i32, i32) {
    %c0_i32 = arith.constant 0 : i32
    %c0_i32_0 = arith.constant 0 : i32
    return %arg0, %c0_i32 : i32, i32
  }
  func.func @transform_2(%arg0: i32) -> (i32, i32) {
    %c0_i32 = arith.constant 0 : i32
    %c0_i32_0 = arith.constant 0 : i32
    %c0_i32_1 = arith.constant 0 : i32
    return %c0_i32, %c0_i32_0 : i32, i32
  }
  func.func @transform_3(%arg0: i32) -> (i32, i32) {
    %c0_i32 = arith.constant 0 : i32
    %c0_i32_0 = arith.constant 0 : i32
    %c0_i32_1 = arith.constant 0 : i32
    return %c0_i32, %c0_i32_0 : i32, i32
  }
  func.func @transform_4(%arg0: i32) -> (i32, i32) {
    %c0_i32 = arith.constant 0 : i32
    %c0_i32_0 = arith.constant 0 : i32
    %c0_i32_1 = arith.constant 0 : i32
    return %c0_i32, %c0_i32_0 : i32, i32
  }
  func.func @transform_5(%arg0: i32) -> (i32, i32) {
    %c0_i32 = arith.constant 0 : i32
    %c0_i32_0 = arith.constant 0 : i32
    %c0_i32_1 = arith.constant 0 : i32
    return %c0_i32, %c0_i32_0 : i32, i32
  }
  func.func @transform_6(%arg0: i32) -> (i32, i32) {
    %c0_i32 = arith.constant 0 : i32
    %c0_i32_0 = arith.constant 0 : i32
    %c0_i32_1 = arith.constant 0 : i32
    return %c0_i32, %c0_i32_0 : i32, i32
  }
  func.func @transform_7(%arg0: i32) -> (i32, i32) {
    %c0_i32 = arith.constant 0 : i32
    %c0_i32_0 = arith.constant 0 : i32
    %c0_i32_1 = arith.constant 0 : i32
    return %c0_i32, %c0_i32_0 : i32, i32
  }
  func.func @transform_8(%arg0: i32) -> (i32, i32) {
    %c0_i32 = arith.constant 0 : i32
    %c0_i32_0 = arith.constant 0 : i32
    %c0_i32_1 = arith.constant 0 : i32
    return %c0_i32, %c0_i32_0 : i32, i32
  }
  func.func @transform_9(%arg0: i32) -> (i32, i32) {
    %c0_i32 = arith.constant 0 : i32
    %c0_i32_0 = arith.constant 0 : i32
    %c0_i32_1 = arith.constant 0 : i32
    return %c0_i32, %c0_i32_0 : i32, i32
  }
  func.func @transform_10(%arg0: i32) -> (i32, i32) {
    %c0_i32 = arith.constant 0 : i32
    %c0_i32_0 = arith.constant 0 : i32
    %c0_i32_1 = arith.constant 0 : i32
    return %c0_i32, %c0_i32_0 : i32, i32
  }
  func.func @transform_11(%arg0: i32) -> (i32, i32) {
    %c0_i32 = arith.constant 0 : i32
    %c0_i32_0 = arith.constant 0 : i32
    return %c0_i32, %arg0 : i32, i32
  }
}

</mosaic_0001>

<llo_original>
// kernel: tpu_custom_call.1
$region0: #{tpu_custom_call.1}
  #allocation0 [shape = 'u32[]', space=smem, size = 0x4, offset = 0x4, fixed_abs, tag = 'smem constant byte address 0x4 - core index']
  #allocation1 [shape = 'u32[144,128]{1,0:T(1,128)}', space=vmem, size = 0x12000, scoped, tag = 'internal scratch']
  %s0 = inlined_call_operand.vmem [shape: f32[256,128], index: 0, kind: input, shape index: {}]
  %s1 = inlined_call_operand.vmem [shape: f32[256,8], index: 1, kind: input, shape index: {}]
  %s2 = inlined_call_operand.vmem [shape: f32[128,64], index: 2, kind: input, shape index: {}]
  %s3 = inlined_call_operand.vmem [shape: f32[3,64], index: 3, kind: input, shape index: {}]
  %s4 = inlined_call_operand.vmem [shape: f32[64,128], index: 4, kind: input, shape index: {}]
  %s5 = inlined_call_operand.vmem [shape: f32[8,128], index: 5, kind: input, shape index: {}]
  %s6 = inlined_call_operand.vmem [shape: f32[1,128], index: 6, kind: input, shape index: {}]
  %s7 = inlined_call_operand.vmem [shape: f32[128,128], index: 7, kind: input, shape index: {}]
  %s8 = inlined_call_operand.vmem [shape: f32[1,128], index: 8, kind: input, shape index: {}]
  %s9 = inlined_call_operand.vmem [shape: f32[2,128], index: 9, kind: input, shape index: {}]
  %s10 = inlined_call_operand.vmem [shape: f32[2,1], index: 10, kind: input, shape index: {}]
  %s11 = inlined_call_operand.hbm [shape: f32[2,256], index: 11, kind: output, shape index: {}]
  %s12 = sld [smem:[#allocation0]]
  $region77: #{tpu_custom_call.1} parent=0
    _
  %s14 = ssub.s32 1, %s12
  %s15 = scalar_select 0, %s14, %s12
  $region1: #{tpu_custom_call.1} parent=0
    #allocation2 [shape = 'u8[2048]{0}', space=vmem, size = 0x800, scoped, tag = 'output window, operand 0']
    #allocation3 [shape = 's32[2]{0}', space=sflag, size = 0x8, scoped, tag = 'scoped memory for tpu_custom_call.1']
    %16 = vsyncpa [#allocation3], 0
    %s17 = scalar_lea.sflag [#allocation3], 1
    %18 = vsyncpa %s17, 0
    loop: start=0, step=1, limit=4
    $region2: #{tpu_custom_call.1} parent=1 // loop_pre_header
      _
    $region3: #{tpu_custom_call.1} parent=1 // loop_header
      %s20 = sphi 0, %s24
      %p21 = scmp.ge.s32.totalorder %s20, 4
      %s30 = sphi 0, %s32
      %s33 = sphi 0, %s30
      %s34 = sphi 0, %s33
      %s50 = sphi 0, %s34
      %s56 = sphi 0, %s58
      %s59 = sphi 0, %s56
      %s60 = sphi 0, %s59
      %s76 = sphi 0, %s60
      %s80 = sphi 0, %s80
      %s82 = sphi 0, %s80
      %s83 = sphi 0, %s82
      %s97 = sphi 0, %s83
      %s101 = sphi 0, %s101
      %s103 = sphi 0, %s101
      %s104 = sphi 0, %s103
      %s118 = sphi 0, %s104
      %s122 = sphi 0, %s122
      %s124 = sphi 0, %s122
      %s125 = sphi 0, %s124
      %s139 = sphi 0, %s125
      %s143 = sphi 0, %s143
      %s145 = sphi 0, %s143
      %s146 = sphi 0, %s145
      %s160 = sphi 0, %s146
      %s164 = sphi 0, %s164
      %s166 = sphi 0, %s164
      %s167 = sphi 0, %s166
      %s181 = sphi 0, %s167
      %s185 = sphi 0, %s185
      %s187 = sphi 0, %s185
      %s188 = sphi 0, %s187
      %s202 = sphi 0, %s188
      %s206 = sphi 0, %s206
      %s208 = sphi 0, %s206
      %s209 = sphi 0, %s208
      %s223 = sphi 0, %s209
      %s227 = sphi 0, %s227
      %s229 = sphi 0, %s227
      %s230 = sphi 0, %s229
      %s244 = sphi 0, %s230
      %s248 = sphi 0, %s248
      %s250 = sphi 0, %s248
      %s251 = sphi 0, %s250
      %s265 = sphi 0, %s251
      %s271 = sphi 0, %s273
      %s274 = sphi 0, %s271
      %s275 = sphi 0, %s274
      %s291 = sphi 0, %s275
    $region4: #{tpu_custom_call.1} parent=1 // loop_header_branch
      %23 = sbr.rel (%p21) target = $region8
    $region5: #{tpu_custom_call.1} parent=1 // loop_body
      %s25 = ssub.s32 %s20, 1
      %s26 = ssub.s32 %s20, 2
      %s27 = sadd.s32 %s20, 1
      %s28 = ssub.s32 %s20, %s27
      %p29 = scmp.eq.s32.totalorder %s28, 0
      %s31 = sadd.s32 %s30, 1
      %s32 = scalar_select %p29, %s30, %s31
      %p35 = pneg %p29
      %p36 = scmp.eq.s32.totalorder %s20, 1
      %p37 = por %p35, %p36
      %p38 = scmp.ne.s32.totalorder %s30, %s33
      %p39 = scmp.eq.s32.totalorder %s20, 0
      %p40 = por %p38, %p39
      %p41 = scmp.ne.s32.totalorder %s30, %s33
      %p42 = scmp.eq.s32.totalorder %s25, 1
      %p43 = por %p41, %p42
      %p44 = scmp.ne.s32.totalorder %s33, %s34
      %p45 = scmp.eq.s32.totalorder %s25, 0
      %p46 = por %p44, %p45
      %p47 = scmp.ne.s32.totalorder %s33, %s34
      %p48 = scmp.eq.s32.totalorder %s26, 1
      %p49 = por %p47, %p48
      %p51 = scmp.ne.s32.totalorder %s34, %s50
      %p52 = scmp.eq.s32.totalorder %s26, 0
      %p53 = por %p51, %p52
      %s54 = ssub.s32 %s20, %s27
      %p55 = scmp.eq.s32.totalorder %s54, 0
      %s57 = sadd.s32 %s56, 1
      %s58 = scalar_select %p55, %s56, %s57
      %p61 = pneg %p55
      %p62 = scmp.eq.s32.totalorder %s20, 1
      %p63 = por %p61, %p62
      %p64 = scmp.ne.s32.totalorder %s56, %s59
      %p65 = scmp.eq.s32.totalorder %s20, 0
      %p66 = por %p64, %p65
      %p67 = scmp.ne.s32.totalorder %s56, %s59
      %p68 = scmp.eq.s32.totalorder %s25, 1
      %p69 = por %p67, %p68
      %p70 = scmp.ne.s32.totalorder %s59, %s60
      %p71 = scmp.eq.s32.totalorder %s25, 0
      %p72 = por %p70, %p71
      %p73 = scmp.ne.s32.totalorder %s59, %s60
      %p74 = scmp.eq.s32.totalorder %s26, 1
      %p75 = por %p73, %p74
      %p77 = scmp.ne.s32.totalorder %s60, %s76
      %p78 = scmp.eq.s32.totalorder %s26, 0
      %p79 = por %p77, %p78
      %s81 = sadd.s32 %s80, 1
      %p84 = scmp.eq.s32.totalorder %s20, 1
      %p85 = scmp.ne.s32.totalorder %s80, %s82
      %p86 = scmp.eq.s32.totalorder %s20, 0
      %p87 = por %p85, %p86
      %p88 = scmp.ne.s32.totalorder %s80, %s82
      %p89 = scmp.eq.s32.totalorder %s25, 1
      %p90 = por %p88, %p89
      %p91 = scmp.ne.s32.totalorder %s82, %s83
      %p92 = scmp.eq.s32.totalorder %s25, 0
      %p93 = por %p91, %p92
      %p94 = scmp.ne.s32.totalorder %s82, %s83
      %p95 = scmp.eq.s32.totalorder %s26, 1
      %p96 = por %p94, %p95
      %p98 = scmp.ne.s32.totalorder %s83, %s97
      %p99 = scmp.eq.s32.totalorder %s26, 0
      %p100 = por %p98, %p99
      %s102 = sadd.s32 %s101, 1
      %p105 = scmp.eq.s32.totalorder %s20, 1
      %p106 = scmp.ne.s32.totalorder %s101, %s103
      %p107 = scmp.eq.s32.totalorder %s20, 0
      %p108 = por %p106, %p107
      %p109 = scmp.ne.s32.totalorder %s101, %s103
      %p110 = scmp.eq.s32.totalorder %s25, 1
      %p111 = por %p109, %p110
      %p112 = scmp.ne.s32.totalorder %s103, %s104
      %p113 = scmp.eq.s32.totalorder %s25, 0
      %p114 = por %p112, %p113
      %p115 = scmp.ne.s32.totalorder %s103, %s104
      %p116 = scmp.eq.s32.totalorder %s26, 1
      %p117 = por %p115, %p116
      %p119 = scmp.ne.s32.totalorder %s104, %s118
      %p120 = scmp.eq.s32.totalorder %s26, 0
      %p121 = por %p119, %p120
      %s123 = sadd.s32 %s122, 1
      %p126 = scmp.eq.s32.totalorder %s20, 1
      %p127 = scmp.ne.s32.totalorder %s122, %s124
      %p128 = scmp.eq.s32.totalorder %s20, 0
      %p129 = por %p127, %p128
      %p130 = scmp.ne.s32.totalorder %s122, %s124
      %p131 = scmp.eq.s32.totalorder %s25, 1
      %p132 = por %p130, %p131
      %p133 = scmp.ne.s32.totalorder %s124, %s125
      %p134 = scmp.eq.s32.totalorder %s25, 0
      %p135 = por %p133, %p134
      %p136 = scmp.ne.s32.totalorder %s124, %s125
      %p137 = scmp.eq.s32.totalorder %s26, 1
      %p138 = por %p136, %p137
      %p140 = scmp.ne.s32.totalorder %s125, %s139
      %p141 = scmp.eq.s32.totalorder %s26, 0
      %p142 = por %p140, %p141
      %s144 = sadd.s32 %s143, 1
      %p147 = scmp.eq.s32.totalorder %s20, 1
      %p148 = scmp.ne.s32.totalorder %s143, %s145
      %p149 = scmp.eq.s32.totalorder %s20, 0
      %p150 = por %p148, %p149
      %p151 = scmp.ne.s32.totalorder %s143, %s145
      %p152 = scmp.eq.s32.totalorder %s25, 1
      %p153 = por %p151, %p152
      %p154 = scmp.ne.s32.totalorder %s145, %s146
      %p155 = scmp.eq.s32.totalorder %s25, 0
      %p156 = por %p154, %p155
      %p157 = scmp.ne.s32.totalorder %s145, %s146
      %p158 = scmp.eq.s32.totalorder %s26, 1
      %p159 = por %p157, %p158
      %p161 = scmp.ne.s32.totalorder %s146, %s160
      %p162 = scmp.eq.s32.totalorder %s26, 0
      %p163 = por %p161, %p162
      %s165 = sadd.s32 %s164, 1
      %p168 = scmp.eq.s32.totalorder %s20, 1
      %p169 = scmp.ne.s32.totalorder %s164, %s166
      %p170 = scmp.eq.s32.totalorder %s20, 0
      %p171 = por %p169, %p170
      %p172 = scmp.ne.s32.totalorder %s164, %s166
      %p173 = scmp.eq.s32.totalorder %s25, 1
      %p174 = por %p172, %p173
      %p175 = scmp.ne.s32.totalorder %s166, %s167
      %p176 = scmp.eq.s32.totalorder %s25, 0
      %p177 = por %p175, %p176
      %p178 = scmp.ne.s32.totalorder %s166, %s167
      %p179 = scmp.eq.s32.totalorder %s26, 1
      %p180 = por %p178, %p179
      %p182 = scmp.ne.s32.totalorder %s167, %s181
      %p183 = scmp.eq.s32.totalorder %s26, 0
      %p184 = por %p182, %p183
      %s186 = sadd.s32 %s185, 1
      %p189 = scmp.eq.s32.totalorder %s20, 1
      %p190 = scmp.ne.s32.totalorder %s185, %s187
      %p191 = scmp.eq.s32.totalorder %s20, 0
      %p192 = por %p190, %p191
      %p193 = scmp.ne.s32.totalorder %s185, %s187
      %p194 = scmp.eq.s32.totalorder %s25, 1
      %p195 = por %p193, %p194
      %p196 = scmp.ne.s32.totalorder %s187, %s188
      %p197 = scmp.eq.s32.totalorder %s25, 0
      %p198 = por %p196, %p197
      %p199 = scmp.ne.s32.totalorder %s187, %s188
      %p200 = scmp.eq.s32.totalorder %s26, 1
      %p201 = por %p199, %p200
      %p203 = scmp.ne.s32.totalorder %s188, %s202
      %p204 = scmp.eq.s32.totalorder %s26, 0
      %p205 = por %p203, %p204
      %s207 = sadd.s32 %s206, 1
      %p210 = scmp.eq.s32.totalorder %s20, 1
      %p211 = scmp.ne.s32.totalorder %s206, %s208
      %p212 = scmp.eq.s32.totalorder %s20, 0
      %p213 = por %p211, %p212
      %p214 = scmp.ne.s32.totalorder %s206, %s208
      %p215 = scmp.eq.s32.totalorder %s25, 1
      %p216 = por %p214, %p215
      %p217 = scmp.ne.s32.totalorder %s208, %s209
      %p218 = scmp.eq.s32.totalorder %s25, 0
      %p219 = por %p217, %p218
      %p220 = scmp.ne.s32.totalorder %s208, %s209
      %p221 = scmp.eq.s32.totalorder %s26, 1
      %p222 = por %p220, %p221
      %p224 = scmp.ne.s32.totalorder %s209, %s223
      %p225 = scmp.eq.s32.totalorder %s26, 0
      %p226 = por %p224, %p225
      %s228 = sadd.s32 %s227, 1
      %p231 = scmp.eq.s32.totalorder %s20, 1
      %p232 = scmp.ne.s32.totalorder %s227, %s229
      %p233 = scmp.eq.s32.totalorder %s20, 0
      %p234 = por %p232, %p233
      %p235 = scmp.ne.s32.totalorder %s227, %s229
      %p236 = scmp.eq.s32.totalorder %s25, 1
      %p237 = por %p235, %p236
      %p238 = scmp.ne.s32.totalorder %s229, %s230
      %p239 = scmp.eq.s32.totalorder %s25, 0
      %p240 = por %p238, %p239
      %p241 = scmp.ne.s32.totalorder %s229, %s230
      %p242 = scmp.eq.s32.totalorder %s26, 1
      %p243 = por %p241, %p242
      %p245 = scmp.ne.s32.totalorder %s230, %s244
      %p246 = scmp.eq.s32.totalorder %s26, 0
      %p247 = por %p245, %p246
      %s249 = sadd.s32 %s248, 1
      %p252 = scmp.eq.s32.totalorder %s20, 1
      %p253 = scmp.ne.s32.totalorder %s248, %s250
      %p254 = scmp.eq.s32.totalorder %s20, 0
      %p255 = por %p253, %p254
      %p256 = scmp.ne.s32.totalorder %s248, %s250
      %p257 = scmp.eq.s32.totalorder %s25, 1
      %p258 = por %p256, %p257
      %p259 = scmp.ne.s32.totalorder %s250, %s251
      %p260 = scmp.eq.s32.totalorder %s25, 0
      %p261 = por %p259, %p260
      %p262 = scmp.ne.s32.totalorder %s250, %s251
      %p263 = scmp.eq.s32.totalorder %s26, 1
      %p264 = por %p262, %p263
      %p266 = scmp.ne.s32.totalorder %s251, %s265
      %p267 = scmp.eq.s32.totalorder %s26, 0
      %p268 = por %p266, %p267
      %s269 = ssub.s32 %s20, %s27
      %p270 = scmp.eq.s32.totalorder %s269, 0
      %s272 = sadd.s32 %s271, 1
      %s273 = scalar_select %p270, %s271, %s272
      %p276 = pneg %p270
      %p277 = scmp.eq.s32.totalorder %s20, 1
      %p278 = por %p276, %p277
      %p279 = scmp.ne.s32.totalorder %s271, %s274
      %p280 = scmp.eq.s32.totalorder %s20, 0
      %p281 = por %p279, %p280
      %p282 = scmp.ne.s32.totalorder %s271, %s274
      %p283 = scmp.eq.s32.totalorder %s25, 1
      %p284 = por %p282, %p283
      %p285 = scmp.ne.s32.totalorder %s274, %s275
      %p286 = scmp.eq.s32.totalorder %s25, 0
      %p287 = por %p285, %p286
      %p288 = scmp.ne.s32.totalorder %s274, %s275
      %p289 = scmp.eq.s32.totalorder %s26, 1
      %p290 = por %p288, %p289
      %p292 = scmp.ne.s32.totalorder %s275, %s291
      %p293 = scmp.eq.s32.totalorder %s26, 0
      %p294 = por %p292, %p293
      %p295 = scmp.le.s32.totalorder 1, %s20
      %p296 = scmp.lt.s32.totalorder %s20, 3
      %p297 = pnand %p295, %p296
      %p298 = pneg %p297
      // Predicated region
      $region9: #{tpu_custom_call.1} parent=5 // pred_check
        _
      $region10: #{tpu_custom_call.1} parent=5 // pred_check_branch
        %300 = sbr.rel (%p297) target = $region12
      $region11: #{tpu_custom_call.1} parent=5 // pred_region
        %s301 = ssub.s32 %s20, 1
        // Predicated region
        $region13: #{tpu_custom_call.1} parent=11 // pred_check
          %p302 = pneg %p93
        $region14: #{tpu_custom_call.1} parent=11 // pred_check_branch
          %304 = sbr.rel (%p302) target = $region16
        $region15: #{tpu_custom_call.1} parent=11 // pred_region
          _
        $region16: #{tpu_custom_call.1} parent=11 // pred_fallthru
          _
        // Predicated region
        $region17: #{tpu_custom_call.1} parent=11 // pred_check
          %p305 = pneg %p114
        $region18: #{tpu_custom_call.1} parent=11 // pred_check_branch
          %307 = sbr.rel (%p305) target = $region20
        $region19: #{tpu_custom_call.1} parent=11 // pred_region
          _
        $region20: #{tpu_custom_call.1} parent=11 // pred_fallthru
          _
        // Predicated region
        $region21: #{tpu_custom_call.1} parent=11 // pred_check
          %p308 = pneg %p135
        $region22: #{tpu_custom_call.1} parent=11 // pred_check_branch
          %310 = sbr.rel (%p308) target = $region24
        $region23: #{tpu_custom_call.1} parent=11 // pred_region
          _
        $region24: #{tpu_custom_call.1} parent=11 // pred_fallthru
          _
        // Predicated region
        $region25: #{tpu_custom_call.1} parent=11 // pred_check
          %p311 = pneg %p156
        $region26: #{tpu_custom_call.1} parent=11 // pred_check_branch
          %313 = sbr.rel (%p311) target = $region28
        $region27: #{tpu_custom_call.1} parent=11 // pred_region
          _
        $region28: #{tpu_custom_call.1} parent=11 // pred_fallthru
          _
        // Predicated region
        $region29: #{tpu_custom_call.1} parent=11 // pred_check
          %p314 = pneg %p177
        $region30: #{tpu_custom_call.1} parent=11 // pred_check_branch
          %316 = sbr.rel (%p314) target = $region32
        $region31: #{tpu_custom_call.1} parent=11 // pred_region
          _
        $region32: #{tpu_custom_call.1} parent=11 // pred_fallthru
          _
        // Predicated region
        $region33: #{tpu_custom_call.1} parent=11 // pred_check
          %p317 = pneg %p198
        $region34: #{tpu_custom_call.1} parent=11 // pred_check_branch
          %319 = sbr.rel (%p317) target = $region36
        $region35: #{tpu_custom_call.1} parent=11 // pred_region
          _
        $region36: #{tpu_custom_call.1} parent=11 // pred_fallthru
          _
        // Predicated region
        $region37: #{tpu_custom_call.1} parent=11 // pred_check
          %p320 = pneg %p219
        $region38: #{tpu_custom_call.1} parent=11 // pred_check_branch
          %322 = sbr.rel (%p320) target = $region40
        $region39: #{tpu_custom_call.1} parent=11 // pred_region
          _
        $region40: #{tpu_custom_call.1} parent=11 // pred_fallthru
          _
        // Predicated region
        $region41: #{tpu_custom_call.1} parent=11 // pred_check
          %p323 = pneg %p240
        $region42: #{tpu_custom_call.1} parent=11 // pred_check_branch
          %325 = sbr.rel (%p323) target = $region44
        $region43: #{tpu_custom_call.1} parent=11 // pred_region
          _
        $region44: #{tpu_custom_call.1} parent=11 // pred_fallthru
          _
        // Predicated region
        $region45: #{tpu_custom_call.1} parent=11 // pred_check
          %p326 = pneg %p261
        $region46: #{tpu_custom_call.1} parent=11 // pred_check_branch
          %328 = sbr.rel (%p326) target = $region48
        $region47: #{tpu_custom_call.1} parent=11 // pred_region
          _
        $region48: #{tpu_custom_call.1} parent=11 // pred_fallthru
          _
      $region12: #{tpu_custom_call.1} parent=5 // pred_fallthru
        _
      %p329 = scmp.lt.s32.totalorder %s20, 2
      // Predicated region
      $region49: #{tpu_custom_call.1} parent=5 // pred_check
        %p330 = pneg %p329
      $region50: #{tpu_custom_call.1} parent=5 // pred_check_branch
        %332 = sbr.rel (%p330) target = $region52
      $region51: #{tpu_custom_call.1} parent=5 // pred_region
        // Predicated region
        $region53: #{tpu_custom_call.1} parent=51 // pred_check
          %p333 = pneg %p40
        $region54: #{tpu_custom_call.1} parent=51 // pred_check_branch
          %335 = sbr.rel (%p333) target = $region56
        $region55: #{tpu_custom_call.1} parent=51 // pred_region
          %s336 = smul.u32 16, %s20
          %p337 = scmp.lt.s32.totalorder %s336, 31
          %s338 = scalar_select %p337, %s336, 31
          %s339 = smul.addr %s338, 8
          %s340 = scalar_lea.vmem %s0, %s339
          %s341 = smul.u32 16, %s20
        $region56: #{tpu_custom_call.1} parent=51 // pred_fallthru
          _
        // Predicated region
        $region57: #{tpu_custom_call.1} parent=51 // pred_check
          %p342 = pneg %p66
        $region58: #{tpu_custom_call.1} parent=51 // pred_check_branch
          %344 = sbr.rel (%p342) target = $region60
        $region59: #{tpu_custom_call.1} parent=51 // pred_region
          %s345 = smul.u32 16, %s20
          %p346 = scmp.lt.s32.totalorder %s345, 31
          %s347 = scalar_select %p346, %s345, 31
          %s348 = smul.addr %s347, 8
          %s349 = scalar_lea.vmem %s1, %s348
          %s350 = smul.u32 16, %s20
        $region60: #{tpu_custom_call.1} parent=51 // pred_fallthru
          _
      $region52: #{tpu_custom_call.1} parent=5 // pred_fallthru
        _
      %p351 = scmp.le.s32.totalorder 1, %s20
      %p352 = scmp.lt.s32.totalorder %s20, 3
      %p353 = pnand %p351, %p352
      %p354 = pneg %p353
      // Predicated region
      $region61: #{tpu_custom_call.1} parent=5 // pred_check
        _
      $region62: #{tpu_custom_call.1} parent=5 // pred_check_branch
        %356 = sbr.rel (%p353) target = $region64
      $region63: #{tpu_custom_call.1} parent=5 // pred_region
        %s357 = ssub.s32 %s20, 1
        %s358 = smul.u32 16, %s25
        %p359 = scmp.lt.s32.totalorder %s358, 31
        %s360 = scalar_select %p359, %s358, 31
        %s361 = smul.addr %s360, 8
        %s362 = scalar_lea.vmem %s0, %s361
        %p363 = pneg %p46
        %p364 = pneg %p43
        %s365 = smul.u32 16, %s25
        %p366 = scmp.lt.s32.totalorder %s365, 31
        %s367 = scalar_select %p366, %s365, 31
        %s368 = smul.addr %s367, 8
        %s369 = scalar_lea.vmem %s1, %s368
        %p370 = pneg %p72
        %p371 = pneg %p69
        %p372 = pneg %p93
        %p373 = pneg %p90
        %p374 = pneg %p114
        %p375 = pneg %p111
        %p376 = pneg %p135
        %p377 = pneg %p132
        %p378 = pneg %p156
        %p379 = pneg %p153
        %p380 = pneg %p177
        %p381 = pneg %p174
        %p382 = pneg %p198
        %p383 = pneg %p195
        %p384 = pneg %p219
        %p385 = pneg %p216
        %p386 = pneg %p240
        %p387 = pneg %p237
        %p388 = pneg %p261
        %p389 = pneg %p258
        %p390 = pneg %p287
        %p391 = pneg %p284
        %s392 = sand.u32 %s274, 1
        %s393 = scalar_lea.sflag [#allocation3], %s392
        %s394 = sand.u32 %s274, 1
        %s395 = smul.addr %s394, 2
        %s396 = scalar_lea.vmem [#allocation2], %s395
        %s397 = smul.u32 16, %s25
        %p398 = scmp.lt.s32.totalorder %s397, 31
        %s399 = scalar_select %p398, %s397, 31
        %s400 = smul.addr %s399, 8
        %s401 = scalar_lea.vmem %s0, %s400
        %s402 = smul.u32 16, %s25
        %s403 = smul.u32 16, %s25
        %p404 = scmp.lt.s32.totalorder %s403, 31
        %s405 = scalar_select %p404, %s403, 31
        %s406 = smul.addr %s405, 8
        %s407 = scalar_lea.vmem %s1, %s406
        %s408 = smul.u32 16, %s25
        %v409 = vld [vmem:[%s401] sm:$0xff]
        %v410 = vld [vmem:[%s401 + $0x8] sm:$0xff]
        %v411 = vld [vmem:[%s401 + $0x10] sm:$0xff]
        %v412 = vld [vmem:[%s401 + $0x18] sm:$0xff]
        %v413 = vld [vmem:[%s401 + $0x20] sm:$0xff]
        %v414 = vld [vmem:[%s401 + $0x28] sm:$0xff]
        %v415 = vld [vmem:[%s401 + $0x30] sm:$0xff]
        %v416 = vld [vmem:[%s401 + $0x38] sm:$0xff]
        %v417 = vld [vmem:[%s401 + $0x40] sm:$0xff]
        %v418 = vld [vmem:[%s401 + $0x48] sm:$0xff]
        %v419 = vld [vmem:[%s401 + $0x50] sm:$0xff]
        %v420 = vld [vmem:[%s401 + $0x58] sm:$0xff]
        %v421 = vld [vmem:[%s401 + $0x60] sm:$0xff]
        %v422 = vld [vmem:[%s401 + $0x68] sm:$0xff]
        %v423 = vld [vmem:[%s401 + $0x70] sm:$0xff]
        %v424 = vld [vmem:[%s401 + $0x78] sm:$0xff]
        %v425 = vld [vmem:[%s407] sm:$0xff]
        %v426 = vld [vmem:[%s407 + $0x8] sm:$0xff]
        %v427 = vld [vmem:[%s407 + $0x10] sm:$0xff]
        %v428 = vld [vmem:[%s407 + $0x18] sm:$0xff]
        %v429 = vld [vmem:[%s407 + $0x20] sm:$0xff]
        %v430 = vld [vmem:[%s407 + $0x28] sm:$0xff]
        %v431 = vld [vmem:[%s407 + $0x30] sm:$0xff]
        %v432 = vld [vmem:[%s407 + $0x38] sm:$0xff]
        %v433 = vld [vmem:[%s407 + $0x40] sm:$0xff]
        %v434 = vld [vmem:[%s407 + $0x48] sm:$0xff]
        %v435 = vld [vmem:[%s407 + $0x50] sm:$0xff]
        %v436 = vld [vmem:[%s407 + $0x58] sm:$0xff]
        %v437 = vld [vmem:[%s407 + $0x60] sm:$0xff]
        %v438 = vld [vmem:[%s407 + $0x68] sm:$0xff]
        %v439 = vld [vmem:[%s407 + $0x70] sm:$0xff]
        %v440 = vld [vmem:[%s407 + $0x78] sm:$0xff]
        %v441 = vld [vmem:[%s3] sm:$0x7]
        %v442 = vld [vmem:[%s2] sm:$0xff]
        %v443 = vld [vmem:[%s2 + $0x8] sm:$0xff]
        %v444 = vld [vmem:[%s2 + $0x10] sm:$0xff]
        %v445 = vld [vmem:[%s2 + $0x18] sm:$0xff]
        %v446 = vld [vmem:[%s2 + $0x20] sm:$0xff]
        %v447 = vld [vmem:[%s2 + $0x28] sm:$0xff]
        %v448 = vld [vmem:[%s2 + $0x30] sm:$0xff]
        %v449 = vld [vmem:[%s2 + $0x38] sm:$0xff]
        %v450 = vld [vmem:[%s2 + $0x40] sm:$0xff]
        %v451 = vld [vmem:[%s2 + $0x48] sm:$0xff]
        %v452 = vld [vmem:[%s2 + $0x50] sm:$0xff]
        %v453 = vld [vmem:[%s2 + $0x58] sm:$0xff]
        %v454 = vld [vmem:[%s2 + $0x60] sm:$0xff]
        %v455 = vld [vmem:[%s2 + $0x68] sm:$0xff]
        %v456 = vld [vmem:[%s2 + $0x70] sm:$0xff]
        %v457 = vld [vmem:[%s2 + $0x78] sm:$0xff]
        %v458 = vlaneseq
        %v459 = vshrl.u32 %v458, 7
        %v460 = vsub.s32 0, %v459
        %v461 = vrot.slane %v441, %v460
        %462 = vmatprep.subr.mxu0 0.0
        %463 = vmatpush1.msra.mxu0 %v457
        %464 = vmatprep.subr.mxu0 0.0
        %465 = vmatpush1.msra.mxu0 %v456
        %466 = vmatprep.subr.mxu0 0.0
        %467 = vmatpush1.msra.mxu0 %v455
        %468 = vmatprep.subr.mxu0 0.0
        %469 = vmatpush1.msra.mxu0 %v454
        %470 = vmatprep.subr.mxu0 0.0
        %471 = vmatpush1.msra.mxu0 %v453
        %472 = vmatprep.subr.mxu0 0.0
        %473 = vmatpush1.msra.mxu0 %v452
        %474 = vmatprep.subr.mxu0 0.0
        %475 = vmatpush1.msra.mxu0 %v451
        %476 = vmatprep.subr.mxu0 0.0
        %477 = vmatpush1.msra.mxu0 %v450
        %478 = vmatprep.subr.mxu0 0.0
        %479 = vmatpush1.msra.mxu0 %v449
        %480 = vmatprep.subr.mxu0 0.0
        %481 = vmatpush1.msra.mxu0 %v448
        %482 = vmatprep.subr.mxu0 0.0
        %483 = vmatpush1.msra.mxu0 %v447
        %484 = vmatprep.subr.mxu0 0.0
        %485 = vmatpush1.msra.mxu0 %v446
        %486 = vmatprep.subr.mxu0 0.0
        %487 = vmatpush1.msra.mxu0 %v445
        %488 = vmatprep.subr.mxu0 0.0
        %489 = vmatpush1.msra.mxu0 %v444
        %490 = vmatprep.subr.mxu0 0.0
        %491 = vmatpush1.msra.mxu0 %v443
        %492 = vmatprep.subr.mxu0 0.0
        %493 = vmatpush1.msra.mxu0 %v442
        %494 = vmatprep.subr.mxu0 0.0
        %495 = vmatpush2.msra.mxu0 0.0
        %496 = vmatprep.subr.mxu0 0.0
        %497 = vmatpush2.msra.mxu0 0.0
        %498 = vmatprep.subr.mxu0 0.0
        %499 = vmatpush2.msra.mxu0 0.0
        %500 = vmatprep.subr.mxu0 0.0
        %501 = vmatpush2.msra.mxu0 0.0
        %502 = vmatprep.subr.mxu0 0.0
        %503 = vmatpush2.msra.mxu0 0.0
        %504 = vmatprep.subr.mxu0 0.0
        %505 = vmatpush2.msra.mxu0 0.0
        %506 = vmatprep.subr.mxu0 0.0
        %507 = vmatpush2.msra.mxu0 0.0
        %508 = vmatprep.subr.mxu0 0.0
        %509 = vmatpush2.msra.mxu0 0.0
        %510 = vmatprep.subr.mxu0 0.0
        %511 = vmatpush2.msra.mxu0 0.0
        %512 = vmatprep.subr.mxu0 0.0
        %513 = vmatpush2.msra.mxu0 0.0
        %514 = vmatprep.subr.mxu0 0.0
        %515 = vmatpush2.msra.mxu0 0.0
        %516 = vmatprep.subr.mxu0 0.0
        %517 = vmatpush2.msra.mxu0 0.0
        %518 = vmatprep.subr.mxu0 0.0
        %519 = vmatpush2.msra.mxu0 0.0
        %520 = vmatprep.subr.mxu0 0.0
        %521 = vmatpush2.msra.mxu0 0.0
        %522 = vmatprep.subr.mxu0 0.0
        %523 = vmatpush2.msra.mxu0 0.0
        %524 = vmatprep.subr.mxu0 0.0
        %525 = vmatpush2.msra.mxu0 0.0
        %526 = vmatprep.mubr.f32.mxu0 0.0
        %527 = vmatmul.mubr.f32.gmra.mxu0 %v409
        %v528 = vpop.f32.mrf.mxu0
        %v529 = vadd.f32 %v461, %v528
        %v530 = vpop.f32.mrf.mxu0
        %531 = vmatprep.mubr.f32.mxu0 0.0
        %532 = vmatmul.mubr.f32.gmra.mxu0 %v410
        %v533 = vpop.f32.mrf.mxu0
        %v534 = vadd.f32 %v461, %v533
        %v535 = vpop.f32.mrf.mxu0
        %536 = vmatprep.mubr.f32.mxu0 0.0
        %537 = vmatmul.mubr.f32.gmra.mxu0 %v411
        %v538 = vpop.f32.mrf.mxu0
        %v539 = vadd.f32 %v461, %v538
        %v540 = vpop.f32.mrf.mxu0
        %541 = vmatprep.mubr.f32.mxu0 0.0
        %542 = vmatmul.mubr.f32.gmra.mxu0 %v412
        %v543 = vpop.f32.mrf.mxu0
        %v544 = vadd.f32 %v461, %v543
        %v545 = vpop.f32.mrf.mxu0
        %546 = vmatprep.mubr.f32.mxu0 0.0
        %547 = vmatmul.mubr.f32.gmra.mxu0 %v413
        %v548 = vpop.f32.mrf.mxu0
        %v549 = vadd.f32 %v461, %v548
        %v550 = vpop.f32.mrf.mxu0
        %551 = vmatprep.mubr.f32.mxu0 0.0
        %552 = vmatmul.mubr.f32.gmra.mxu0 %v414
        %v553 = vpop.f32.mrf.mxu0
        %v554 = vadd.f32 %v461, %v553
        %v555 = vpop.f32.mrf.mxu0
        %556 = vmatprep.mubr.f32.mxu0 0.0
        %557 = vmatmul.mubr.f32.gmra.mxu0 %v415
        %v558 = vpop.f32.mrf.mxu0
        %v559 = vadd.f32 %v461, %v558
        %v560 = vpop.f32.mrf.mxu0
        %561 = vmatprep.mubr.f32.mxu0 0.0
        %562 = vmatmul.mubr.f32.gmra.mxu0 %v416
        %v563 = vpop.f32.mrf.mxu0
        %v564 = vadd.f32 %v461, %v563
        %v565 = vpop.f32.mrf.mxu0
        %566 = vmatprep.mubr.f32.mxu0 0.0
        %567 = vmatmul.mubr.f32.gmra.mxu0 %v417
        %v568 = vpop.f32.mrf.mxu0
        %v569 = vadd.f32 %v461, %v568
        %v570 = vpop.f32.mrf.mxu0
        %571 = vmatprep.mubr.f32.mxu0 0.0
        %572 = vmatmul.mubr.f32.gmra.mxu0 %v418
        %v573 = vpop.f32.mrf.mxu0
        %v574 = vadd.f32 %v461, %v573
        %v575 = vpop.f32.mrf.mxu0
        %576 = vmatprep.mubr.f32.mxu0 0.0
        %577 = vmatmul.mubr.f32.gmra.mxu0 %v419
        %v578 = vpop.f32.mrf.mxu0
        %v579 = vadd.f32 %v461, %v578
        %v580 = vpop.f32.mrf.mxu0
        %581 = vmatprep.mubr.f32.mxu0 0.0
        %582 = vmatmul.mubr.f32.gmra.mxu0 %v420
        %v583 = vpop.f32.mrf.mxu0
        %v584 = vadd.f32 %v461, %v583
        %v585 = vpop.f32.mrf.mxu0
        %586 = vmatprep.mubr.f32.mxu0 0.0
        %587 = vmatmul.mubr.f32.gmra.mxu0 %v421
        %v588 = vpop.f32.mrf.mxu0
        %v589 = vadd.f32 %v461, %v588
        %v590 = vpop.f32.mrf.mxu0
        %591 = vmatprep.mubr.f32.mxu0 0.0
        %592 = vmatmul.mubr.f32.gmra.mxu0 %v422
        %v593 = vpop.f32.mrf.mxu0
        %v594 = vadd.f32 %v461, %v593
        %v595 = vpop.f32.mrf.mxu0
        %596 = vmatprep.mubr.f32.mxu0 0.0
        %597 = vmatmul.mubr.f32.gmra.mxu0 %v423
        %v598 = vpop.f32.mrf.mxu0
        %v599 = vadd.f32 %v461, %v598
        %v600 = vpop.f32.mrf.mxu0
        %601 = vmatprep.mubr.f32.mxu0 0.0
        %602 = vmatmul.mubr.f32.gmra.mxu0 %v424
        %v603 = vpop.f32.mrf.mxu0
        %v604 = vadd.f32 %v461, %v603
        %v605 = vpop.f32.mrf.mxu0
        %606 = vdwg.mxu0
        %vm607 = vcmask 523264
        %v608 = vsel %vm607, %v529, 0.0
        %609 = vadd.xlane.f32.xlu0 %v608
        %v610 = vpop.xlane.xlu0 %609
        %v611 = vsel %vm607, %v534, 0.0
        %612 = vadd.xlane.f32.xlu0 %v611
        %v613 = vpop.xlane.xlu0 %612
        %v614 = vsel %vm607, %v539, 0.0
        %615 = vadd.xlane.f32.xlu0 %v614
        %v616 = vpop.xlane.xlu0 %615
        %v617 = vsel %vm607, %v544, 0.0
        %618 = vadd.xlane.f32.xlu0 %v617
        %v619 = vpop.xlane.xlu0 %618
        %v620 = vsel %vm607, %v549, 0.0
        %621 = vadd.xlane.f32.xlu0 %v620
        %v622 = vpop.xlane.xlu0 %621
        %v623 = vsel %vm607, %v554, 0.0
        %624 = vadd.xlane.f32.xlu0 %v623
        %v625 = vpop.xlane.xlu0 %624
        %v626 = vsel %vm607, %v559, 0.0
        %627 = vadd.xlane.f32.xlu0 %v626
        %v628 = vpop.xlane.xlu0 %627
        %v629 = vsel %vm607, %v564, 0.0
        %630 = vadd.xlane.f32.xlu0 %v629
        %v631 = vpop.xlane.xlu0 %630
        %v632 = vsel %vm607, %v569, 0.0
        %633 = vadd.xlane.f32.xlu0 %v632
        %v634 = vpop.xlane.xlu0 %633
        %v635 = vsel %vm607, %v574, 0.0
        %636 = vadd.xlane.f32.xlu0 %v635
        %v637 = vpop.xlane.xlu0 %636
        %v638 = vsel %vm607, %v579, 0.0
        %639 = vadd.xlane.f32.xlu0 %v638
        %v640 = vpop.xlane.xlu0 %639
        %v641 = vsel %vm607, %v584, 0.0
        %642 = vadd.xlane.f32.xlu0 %v641
        %v643 = vpop.xlane.xlu0 %642
        %v644 = vsel %vm607, %v589, 0.0
        %645 = vadd.xlane.f32.xlu0 %v644
        %v646 = vpop.xlane.xlu0 %645
        %v647 = vsel %vm607, %v594, 0.0
        %648 = vadd.xlane.f32.xlu0 %v647
        %v649 = vpop.xlane.xlu0 %648
        %v650 = vsel %vm607, %v599, 0.0
        %651 = vadd.xlane.f32.xlu0 %v650
        %v652 = vpop.xlane.xlu0 %651
        %v653 = vsel %vm607, %v604, 0.0
        %654 = vadd.xlane.f32.xlu0 %v653
        %v655 = vpop.xlane.xlu0 %654
        %v656 = vrcp.pop 64.0
        %v657 = vmul.f32 %v610, %v656
        %v658 = vmul.f32 %v613, %v656
        %v659 = vmul.f32 %v616, %v656
        %v660 = vmul.f32 %v619, %v656
        %v661 = vmul.f32 %v622, %v656
        %v662 = vmul.f32 %v625, %v656
        %v663 = vmul.f32 %v628, %v656
        %v664 = vmul.f32 %v631, %v656
        %v665 = vmul.f32 %v634, %v656
        %v666 = vmul.f32 %v637, %v656
        %v667 = vmul.f32 %v640, %v656
        %v668 = vmul.f32 %v643, %v656
        %v669 = vmul.f32 %v646, %v656
        %v670 = vmul.f32 %v649, %v656
        %v671 = vmul.f32 %v652, %v656
        %v672 = vmul.f32 %v655, %v656
        %v673 = vsub.f32 %v529, %v657
        %v674 = vsub.f32 %v534, %v658
        %v675 = vsub.f32 %v539, %v659
        %v676 = vsub.f32 %v544, %v660
        %v677 = vsub.f32 %v549, %v661
        %v678 = vsub.f32 %v554, %v662
        %v679 = vsub.f32 %v559, %v663
        %v680 = vsub.f32 %v564, %v664
        %v681 = vsub.f32 %v569, %v665
        %v682 = vsub.f32 %v574, %v666
        %v683 = vsub.f32 %v579, %v667
        %v684 = vsub.f32 %v584, %v668
        %v685 = vsub.f32 %v589, %v669
        %v686 = vsub.f32 %v594, %v670
        %v687 = vsub.f32 %v599, %v671
        %v688 = vsub.f32 %v604, %v672
        %v689 = vmul.f32 %v673, %v673
        %v690 = vmul.f32 %v674, %v674
        %v691 = vmul.f32 %v675, %v675
        %v692 = vmul.f32 %v676, %v676
        %v693 = vmul.f32 %v677, %v677
        %v694 = vmul.f32 %v678, %v678
        %v695 = vmul.f32 %v679, %v679
        %v696 = vmul.f32 %v680, %v680
        %v697 = vmul.f32 %v681, %v681
        %v698 = vmul.f32 %v682, %v682
        %v699 = vmul.f32 %v683, %v683
        %v700 = vmul.f32 %v684, %v684
        %v701 = vmul.f32 %v685, %v685
        %v702 = vmul.f32 %v686, %v686
        %v703 = vmul.f32 %v687, %v687
        %v704 = vmul.f32 %v688, %v688
        %v705 = vsel %vm607, %v689, 0.0
        %706 = vadd.xlane.f32.xlu0 %v705
        %v707 = vpop.xlane.xlu0 %706
        %v708 = vsel %vm607, %v690, 0.0
        %709 = vadd.xlane.f32.xlu0 %v708
        %v710 = vpop.xlane.xlu0 %709
        %v711 = vsel %vm607, %v691, 0.0
        %712 = vadd.xlane.f32.xlu0 %v711
        %v713 = vpop.xlane.xlu0 %712
        %v714 = vsel %vm607, %v692, 0.0
        %715 = vadd.xlane.f32.xlu0 %v714
        %v716 = vpop.xlane.xlu0 %715
        %v717 = vsel %vm607, %v693, 0.0
        %718 = vadd.xlane.f32.xlu0 %v717
        %v719 = vpop.xlane.xlu0 %718
        %v720 = vsel %vm607, %v694, 0.0
        %721 = vadd.xlane.f32.xlu0 %v720
        %v722 = vpop.xlane.xlu0 %721
        %v723 = vsel %vm607, %v695, 0.0
        %724 = vadd.xlane.f32.xlu0 %v723
        %v725 = vpop.xlane.xlu0 %724
        %v726 = vsel %vm607, %v696, 0.0
        %727 = vadd.xlane.f32.xlu0 %v726
        %v728 = vpop.xlane.xlu0 %727
        %v729 = vsel %vm607, %v697, 0.0
        %730 = vadd.xlane.f32.xlu0 %v729
        %v731 = vpop.xlane.xlu0 %730
        %v732 = vsel %vm607, %v698, 0.0
        %733 = vadd.xlane.f32.xlu0 %v732
        %v734 = vpop.xlane.xlu0 %733
        %v735 = vsel %vm607, %v699, 0.0
        %736 = vadd.xlane.f32.xlu0 %v735
        %v737 = vpop.xlane.xlu0 %736
        %v738 = vsel %vm607, %v700, 0.0
        %739 = vadd.xlane.f32.xlu0 %v738
        %v740 = vpop.xlane.xlu0 %739
        %v741 = vsel %vm607, %v701, 0.0
        %742 = vadd.xlane.f32.xlu0 %v741
        %v743 = vpop.xlane.xlu0 %742
        %v744 = vsel %vm607, %v702, 0.0
        %745 = vadd.xlane.f32.xlu0 %v744
        %v746 = vpop.xlane.xlu0 %745
        %v747 = vsel %vm607, %v703, 0.0
        %748 = vadd.xlane.f32.xlu0 %v747
        %v749 = vpop.xlane.xlu0 %748
        %v750 = vsel %vm607, %v704, 0.0
        %751 = vadd.xlane.f32.xlu0 %v750
        %v752 = vpop.xlane.xlu0 %751
        %v753 = vmul.f32 %v707, %v656
        %v754 = vmul.f32 %v710, %v656
        %v755 = vmul.f32 %v713, %v656
        %v756 = vmul.f32 %v716, %v656
        %v757 = vmul.f32 %v719, %v656
        %v758 = vmul.f32 %v722, %v656
        %v759 = vmul.f32 %v725, %v656
        %v760 = vmul.f32 %v728, %v656
        %v761 = vmul.f32 %v731, %v656
        %v762 = vmul.f32 %v734, %v656
        %v763 = vmul.f32 %v737, %v656
        %v764 = vmul.f32 %v740, %v656
        %v765 = vmul.f32 %v743, %v656
        %v766 = vmul.f32 %v746, %v656
        %v767 = vmul.f32 %v749, %v656
        %v768 = vmul.f32 %v752, %v656
        %v769 = vadd.f32 %v753, 1e-05
        %v770 = vadd.f32 %v754, 1e-05
        %v771 = vadd.f32 %v755, 1e-05
        %v772 = vadd.f32 %v756, 1e-05
        %v773 = vadd.f32 %v757, 1e-05
        %v774 = vadd.f32 %v758, 1e-05
        %v775 = vadd.f32 %v759, 1e-05
        %v776 = vadd.f32 %v760, 1e-05
        %v777 = vadd.f32 %v761, 1e-05
        %v778 = vadd.f32 %v762, 1e-05
        %v779 = vadd.f32 %v763, 1e-05
        %v780 = vadd.f32 %v764, 1e-05
        %v781 = vadd.f32 %v765, 1e-05
        %v782 = vadd.f32 %v766, 1e-05
        %v783 = vadd.f32 %v767, 1e-05
        %v784 = vadd.f32 %v768, 1e-05
        %v785 = vrsqrt.pop %v769
        %v786 = vrsqrt.pop %v770
        %v787 = vrsqrt.pop %v771
        %v788 = vrsqrt.pop %v772
        %v789 = vrsqrt.pop %v773
        %v790 = vrsqrt.pop %v774
        %v791 = vrsqrt.pop %v775
        %v792 = vrsqrt.pop %v776
        %v793 = vrsqrt.pop %v777
        %v794 = vrsqrt.pop %v778
        %v795 = vrsqrt.pop %v779
        %v796 = vrsqrt.pop %v780
        %v797 = vrsqrt.pop %v781
        %v798 = vrsqrt.pop %v782
        %v799 = vrsqrt.pop %v783
        %v800 = vrsqrt.pop %v784
        %v801 = vmul.f32 %v673, %v785
        %v802 = vmul.f32 %v674, %v786
        %v803 = vmul.f32 %v675, %v787
        %v804 = vmul.f32 %v676, %v788
        %v805 = vmul.f32 %v677, %v789
        %v806 = vmul.f32 %v678, %v790
        %v807 = vmul.f32 %v679, %v791
        %v808 = vmul.f32 %v680, %v792
        %v809 = vmul.f32 %v681, %v793
        %v810 = vmul.f32 %v682, %v794
        %v811 = vmul.f32 %v683, %v795
        %v812 = vmul.f32 %v684, %v796
        %v813 = vmul.f32 %v685, %v797
        %v814 = vmul.f32 %v686, %v798
        %v815 = vmul.f32 %v687, %v799
        %v816 = vmul.f32 %v688, %v800
        %v817 = vlaneseq
        %v818 = vshrl.u32 %v817, 7
        %v819 = vsub.s32 1, %v818
        %v820 = vrot.slane %v441, %v819
        %v821 = vmul.f32 %v801, %v820
        %v822 = vmul.f32 %v802, %v820
        %v823 = vmul.f32 %v803, %v820
        %v824 = vmul.f32 %v804, %v820
        %v825 = vmul.f32 %v805, %v820
        %v826 = vmul.f32 %v806, %v820
        %v827 = vmul.f32 %v807, %v820
        %v828 = vmul.f32 %v808, %v820
        %v829 = vmul.f32 %v809, %v820
        %v830 = vmul.f32 %v810, %v820
        %v831 = vmul.f32 %v811, %v820
        %v832 = vmul.f32 %v812, %v820
        %v833 = vmul.f32 %v813, %v820
        %v834 = vmul.f32 %v814, %v820
        %v835 = vmul.f32 %v815, %v820
        %v836 = vmul.f32 %v816, %v820
        %v837 = vlaneseq
        %v838 = vshrl.u32 %v837, 7
        %v839 = vsub.s32 2, %v838
        %v840 = vrot.slane %v441, %v839
        %v841 = vadd.f32 %v821, %v840
        %v842 = vadd.f32 %v822, %v840
        %v843 = vadd.f32 %v823, %v840
        %v844 = vadd.f32 %v824, %v840
        %v845 = vadd.f32 %v825, %v840
        %v846 = vadd.f32 %v826, %v840
        %v847 = vadd.f32 %v827, %v840
        %v848 = vadd.f32 %v828, %v840
        %v849 = vadd.f32 %v829, %v840
        %v850 = vadd.f32 %v830, %v840
        %v851 = vadd.f32 %v831, %v840
        %v852 = vadd.f32 %v832, %v840
        %v853 = vadd.f32 %v833, %v840
        %v854 = vadd.f32 %v834, %v840
        %v855 = vadd.f32 %v835, %v840
        %v856 = vadd.f32 %v836, %v840
        %v857 = vtanh.pop %v841
        %v858 = vtanh.pop %v842
        %v859 = vtanh.pop %v843
        %v860 = vtanh.pop %v844
        %v861 = vtanh.pop %v845
        %v862 = vtanh.pop %v846
        %v863 = vtanh.pop %v847
        %v864 = vtanh.pop %v848
        %v865 = vtanh.pop %v849
        %v866 = vtanh.pop %v850
        %v867 = vtanh.pop %v851
        %v868 = vtanh.pop %v852
        %v869 = vtanh.pop %v853
        %v870 = vtanh.pop %v854
        %v871 = vtanh.pop %v855
        %v872 = vtanh.pop %v856
        %v873 = vld [vmem:[%s4] sm:$0xff]
        %v874 = vld [vmem:[%s4 + $0x8] sm:$0xff]
        %v875 = vld [vmem:[%s4 + $0x10] sm:$0xff]
        %v876 = vld [vmem:[%s4 + $0x18] sm:$0xff]
        %v877 = vld [vmem:[%s4 + $0x20] sm:$0xff]
        %v878 = vld [vmem:[%s4 + $0x28] sm:$0xff]
        %v879 = vld [vmem:[%s4 + $0x30] sm:$0xff]
        %v880 = vld [vmem:[%s4 + $0x38] sm:$0xff]
        %v881 = vld [vmem:[%s5] sm:$0xff]
        %vm882 = vcmask 64512
        %v884 = vsel %vm882, %v425, 0
        %v887 = vsel %vm882, %v426, 0
        %v890 = vsel %vm882, %v427, 0
        %v893 = vsel %vm882, %v428, 0
        %v896 = vsel %vm882, %v429, 0
        %v899 = vsel %vm882, %v430, 0
        %v902 = vsel %vm882, %v431, 0
        %v905 = vsel %vm882, %v432, 0
        %v908 = vsel %vm882, %v433, 0
        %v911 = vsel %vm882, %v434, 0
        %v914 = vsel %vm882, %v435, 0
        %v917 = vsel %vm882, %v436, 0
        %v920 = vsel %vm882, %v437, 0
        %v923 = vsel %vm882, %v438, 0
        %v926 = vsel %vm882, %v439, 0
        %v929 = vsel %vm882, %v440, 0
        %931 = vmatprep.subr.mxu0 0.0
        %932 = vmatpush1.msra.mxu0 0.0
        %933 = vmatprep.subr.mxu0 0.0
        %934 = vmatpush1.msra.mxu0 0.0
        %935 = vmatprep.subr.mxu0 0.0
        %936 = vmatpush1.msra.mxu0 0.0
        %937 = vmatprep.subr.mxu0 0.0
        %938 = vmatpush1.msra.mxu0 0.0
        %939 = vmatprep.subr.mxu0 0.0
        %940 = vmatpush1.msra.mxu0 0.0
        %941 = vmatprep.subr.mxu0 0.0
        %942 = vmatpush1.msra.mxu0 0.0
        %943 = vmatprep.subr.mxu0 0.0
        %944 = vmatpush1.msra.mxu0 0.0
        %945 = vmatprep.subr.mxu0 0.0
        %946 = vmatpush1.msra.mxu0 0.0
        %947 = vmatprep.subr.mxu0 0.0
        %948 = vmatpush1.msra.mxu0 0.0
        %949 = vmatprep.subr.mxu0 0.0
        %950 = vmatpush1.msra.mxu0 0.0
        %951 = vmatprep.subr.mxu0 0.0
        %952 = vmatpush1.msra.mxu0 0.0
        %953 = vmatprep.subr.mxu0 0.0
        %954 = vmatpush1.msra.mxu0 0.0
        %955 = vmatprep.subr.mxu0 0.0
        %956 = vmatpush1.msra.mxu0 0.0
        %957 = vmatprep.subr.mxu0 0.0
        %958 = vmatpush1.msra.mxu0 0.0
        %959 = vmatprep.subr.mxu0 0.0
        %960 = vmatpush1.msra.mxu0 0.0
        %961 = vmatprep.subr.mxu0 0.0
        %962 = vmatpush1.msra.mxu0 %v881
        %963 = vmatprep.subr.mxu0 0.0
        %964 = vmatpush2.msra.mxu0 0.0
        %965 = vmatprep.subr.mxu0 0.0
        %966 = vmatpush2.msra.mxu0 0.0
        %967 = vmatprep.subr.mxu0 0.0
        %968 = vmatpush2.msra.mxu0 0.0
        %969 = vmatprep.subr.mxu0 0.0
        %970 = vmatpush2.msra.mxu0 0.0
        %971 = vmatprep.subr.mxu0 0.0
        %972 = vmatpush2.msra.mxu0 0.0
        %973 = vmatprep.subr.mxu0 0.0
        %974 = vmatpush2.msra.mxu0 0.0
        %975 = vmatprep.subr.mxu0 0.0
        %976 = vmatpush2.msra.mxu0 0.0
        %977 = vmatprep.subr.mxu0 0.0
        %978 = vmatpush2.msra.mxu0 0.0
        %979 = vmatprep.subr.mxu0 0.0
        %980 = vmatpush2.msra.mxu0 0.0
        %981 = vmatprep.subr.mxu0 0.0
        %982 = vmatpush2.msra.mxu0 0.0
        %983 = vmatprep.subr.mxu0 0.0
        %984 = vmatpush2.msra.mxu0 0.0
        %985 = vmatprep.subr.mxu0 0.0
        %986 = vmatpush2.msra.mxu0 0.0
        %987 = vmatprep.subr.mxu0 0.0
        %988 = vmatpush2.msra.mxu0 0.0
        %989 = vmatprep.subr.mxu0 0.0
        %990 = vmatpush2.msra.mxu0 0.0
        %991 = vmatprep.subr.mxu0 0.0
        %992 = vmatpush2.msra.mxu0 0.0
        %993 = vmatprep.subr.mxu0 0.0
        %994 = vmatpush2.msra.mxu0 0.0
        %995 = vmatprep.mubr.f32.mxu0 0.0
        %996 = vmatmul.mubr.f32.gmra.mxu0 %v884
        %v997 = vpop.f32.mrf.mxu0
        %v998 = vadd.f32 0.0, %v997
        %v999 = vpop.f32.mrf.mxu0
        %1000 = vmatprep.mubr.f32.mxu0 0.0
        %1001 = vmatmul.mubr.f32.gmra.mxu0 %v887
        %v1002 = vpop.f32.mrf.mxu0
        %v1003 = vadd.f32 0.0, %v1002
        %v1004 = vpop.f32.mrf.mxu0
        %1005 = vmatprep.mubr.f32.mxu0 0.0
        %1006 = vmatmul.mubr.f32.gmra.mxu0 %v890
        %v1007 = vpop.f32.mrf.mxu0
        %v1008 = vadd.f32 0.0, %v1007
        %v1009 = vpop.f32.mrf.mxu0
        %1010 = vmatprep.mubr.f32.mxu0 0.0
        %1011 = vmatmul.mubr.f32.gmra.mxu0 %v893
        %v1012 = vpop.f32.mrf.mxu0
        %v1013 = vadd.f32 0.0, %v1012
        %v1014 = vpop.f32.mrf.mxu0
        %1015 = vmatprep.mubr.f32.mxu0 0.0
        %1016 = vmatmul.mubr.f32.gmra.mxu0 %v896
        %v1017 = vpop.f32.mrf.mxu0
        %v1018 = vadd.f32 0.0, %v1017
        %v1019 = vpop.f32.mrf.mxu0
        %1020 = vmatprep.mubr.f32.mxu0 0.0
        %1021 = vmatmul.mubr.f32.gmra.mxu0 %v899
        %v1022 = vpop.f32.mrf.mxu0
        %v1023 = vadd.f32 0.0, %v1022
        %v1024 = vpop.f32.mrf.mxu0
        %1025 = vmatprep.mubr.f32.mxu0 0.0
        %1026 = vmatmul.mubr.f32.gmra.mxu0 %v902
        %v1027 = vpop.f32.mrf.mxu0
        %v1028 = vadd.f32 0.0, %v1027
        %v1029 = vpop.f32.mrf.mxu0
        %1030 = vmatprep.mubr.f32.mxu0 0.0
        %1031 = vmatmul.mubr.f32.gmra.mxu0 %v905
        %v1032 = vpop.f32.mrf.mxu0
        %v1033 = vadd.f32 0.0, %v1032
        %v1034 = vpop.f32.mrf.mxu0
        %1035 = vmatprep.mubr.f32.mxu0 0.0
        %1036 = vmatmul.mubr.f32.gmra.mxu0 %v908
        %v1037 = vpop.f32.mrf.mxu0
        %v1038 = vadd.f32 0.0, %v1037
        %v1039 = vpop.f32.mrf.mxu0
        %1040 = vmatprep.mubr.f32.mxu0 0.0
        %1041 = vmatmul.mubr.f32.gmra.mxu0 %v911
        %v1042 = vpop.f32.mrf.mxu0
        %v1043 = vadd.f32 0.0, %v1042
        %v1044 = vpop.f32.mrf.mxu0
        %1045 = vmatprep.mubr.f32.mxu0 0.0
        %1046 = vmatmul.mubr.f32.gmra.mxu0 %v914
        %v1047 = vpop.f32.mrf.mxu0
        %v1048 = vadd.f32 0.0, %v1047
        %v1049 = vpop.f32.mrf.mxu0
        %1050 = vmatprep.mubr.f32.mxu0 0.0
        %1051 = vmatmul.mubr.f32.gmra.mxu0 %v917
        %v1052 = vpop.f32.mrf.mxu0
        %v1053 = vadd.f32 0.0, %v1052
        %v1054 = vpop.f32.mrf.mxu0
        %1055 = vmatprep.mubr.f32.mxu0 0.0
        %1056 = vmatmul.mubr.f32.gmra.mxu0 %v920
        %v1057 = vpop.f32.mrf.mxu0
        %v1058 = vadd.f32 0.0, %v1057
        %v1059 = vpop.f32.mrf.mxu0
        %1060 = vmatprep.mubr.f32.mxu0 0.0
        %1061 = vmatmul.mubr.f32.gmra.mxu0 %v923
        %v1062 = vpop.f32.mrf.mxu0
        %v1063 = vadd.f32 0.0, %v1062
        %v1064 = vpop.f32.mrf.mxu0
        %1065 = vmatprep.mubr.f32.mxu0 0.0
        %1066 = vmatmul.mubr.f32.gmra.mxu0 %v926
        %v1067 = vpop.f32.mrf.mxu0
        %v1068 = vadd.f32 0.0, %v1067
        %v1069 = vpop.f32.mrf.mxu0
        %1070 = vmatprep.mubr.f32.mxu0 0.0
        %1071 = vmatmul.mubr.f32.gmra.mxu0 %v929
        %v1072 = vpop.f32.mrf.mxu0
        %v1073 = vadd.f32 0.0, %v1072
        %v1074 = vpop.f32.mrf.mxu0
        %1075 = vdwg.mxu0
        %v1077 = vsel %vm607, %v857, 0
        %v1080 = vsel %vm607, %v858, 0
        %v1083 = vsel %vm607, %v859, 0
        %v1086 = vsel %vm607, %v860, 0
        %v1089 = vsel %vm607, %v861, 0
        %v1092 = vsel %vm607, %v862, 0
        %v1095 = vsel %vm607, %v863, 0
        %v1098 = vsel %vm607, %v864, 0
        %v1101 = vsel %vm607, %v865, 0
        %v1104 = vsel %vm607, %v866, 0
        %v1107 = vsel %vm607, %v867, 0
        %v1110 = vsel %vm607, %v868, 0
        %v1113 = vsel %vm607, %v869, 0
        %v1116 = vsel %vm607, %v870, 0
        %v1119 = vsel %vm607, %v871, 0
        %v1122 = vsel %vm607, %v872, 0
        %1124 = vmatprep.subr.mxu0 0.0
        %1125 = vmatpush1.msra.mxu0 0.0
        %1126 = vmatprep.subr.mxu0 0.0
        %1127 = vmatpush1.msra.mxu0 0.0
        %1128 = vmatprep.subr.mxu0 0.0
        %1129 = vmatpush1.msra.mxu0 0.0
        %1130 = vmatprep.subr.mxu0 0.0
        %1131 = vmatpush1.msra.mxu0 0.0
        %1132 = vmatprep.subr.mxu0 0.0
        %1133 = vmatpush1.msra.mxu0 0.0
        %1134 = vmatprep.subr.mxu0 0.0
        %1135 = vmatpush1.msra.mxu0 0.0
        %1136 = vmatprep.subr.mxu0 0.0
        %1137 = vmatpush1.msra.mxu0 0.0
        %1138 = vmatprep.subr.mxu0 0.0
        %1139 = vmatpush1.msra.mxu0 0.0
        %1140 = vmatprep.subr.mxu0 0.0
        %1141 = vmatpush1.msra.mxu0 %v880
        %1142 = vmatprep.subr.mxu0 0.0
        %1143 = vmatpush1.msra.mxu0 %v879
        %1144 = vmatprep.subr.mxu0 0.0
        %1145 = vmatpush1.msra.mxu0 %v878
        %1146 = vmatprep.subr.mxu0 0.0
        %1147 = vmatpush1.msra.mxu0 %v877
        %1148 = vmatprep.subr.mxu0 0.0
        %1149 = vmatpush1.msra.mxu0 %v876
        %1150 = vmatprep.subr.mxu0 0.0
        %1151 = vmatpush1.msra.mxu0 %v875
        %1152 = vmatprep.subr.mxu0 0.0
        %1153 = vmatpush1.msra.mxu0 %v874
        %1154 = vmatprep.subr.mxu0 0.0
        %1155 = vmatpush1.msra.mxu0 %v873
        %1156 = vmatprep.subr.mxu0 0.0
        %1157 = vmatpush2.msra.mxu0 0.0
        %1158 = vmatprep.subr.mxu0 0.0
        %1159 = vmatpush2.msra.mxu0 0.0
        %1160 = vmatprep.subr.mxu0 0.0
        %1161 = vmatpush2.msra.mxu0 0.0
        %1162 = vmatprep.subr.mxu0 0.0
        %1163 = vmatpush2.msra.mxu0 0.0
        %1164 = vmatprep.subr.mxu0 0.0
        %1165 = vmatpush2.msra.mxu0 0.0
        %1166 = vmatprep.subr.mxu0 0.0
        %1167 = vmatpush2.msra.mxu0 0.0
        %1168 = vmatprep.subr.mxu0 0.0
        %1169 = vmatpush2.msra.mxu0 0.0
        %1170 = vmatprep.subr.mxu0 0.0
        %1171 = vmatpush2.msra.mxu0 0.0
        %1172 = vmatprep.subr.mxu0 0.0
        %1173 = vmatpush2.msra.mxu0 0.0
        %1174 = vmatprep.subr.mxu0 0.0
        %1175 = vmatpush2.msra.mxu0 0.0
        %1176 = vmatprep.subr.mxu0 0.0
        %1177 = vmatpush2.msra.mxu0 0.0
        %1178 = vmatprep.subr.mxu0 0.0
        %1179 = vmatpush2.msra.mxu0 0.0
        %1180 = vmatprep.subr.mxu0 0.0
        %1181 = vmatpush2.msra.mxu0 0.0
        %1182 = vmatprep.subr.mxu0 0.0
        %1183 = vmatpush2.msra.mxu0 0.0
        %1184 = vmatprep.subr.mxu0 0.0
        %1185 = vmatpush2.msra.mxu0 0.0
        %1186 = vmatprep.subr.mxu0 0.0
        %1187 = vmatpush2.msra.mxu0 0.0
        %1188 = vmatprep.mubr.f32.mxu0 0.0
        %1189 = vmatmul.mubr.f32.gmra.mxu0 %v1077
        %v1190 = vpop.f32.mrf.mxu0
        %v1191 = vadd.f32 %v998, %v1190
        %v1192 = vpop.f32.mrf.mxu0
        %1193 = vmatprep.mubr.f32.mxu0 0.0
        %1194 = vmatmul.mubr.f32.gmra.mxu0 %v1080
        %v1195 = vpop.f32.mrf.mxu0
        %v1196 = vadd.f32 %v1003, %v1195
        %v1197 = vpop.f32.mrf.mxu0
        %1198 = vmatprep.mubr.f32.mxu0 0.0
        %1199 = vmatmul.mubr.f32.gmra.mxu0 %v1083
        %v1200 = vpop.f32.mrf.mxu0
        %v1201 = vadd.f32 %v1008, %v1200
        %v1202 = vpop.f32.mrf.mxu0
        %1203 = vmatprep.mubr.f32.mxu0 0.0
        %1204 = vmatmul.mubr.f32.gmra.mxu0 %v1086
        %v1205 = vpop.f32.mrf.mxu0
        %v1206 = vadd.f32 %v1013, %v1205
        %v1207 = vpop.f32.mrf.mxu0
        %1208 = vmatprep.mubr.f32.mxu0 0.0
        %1209 = vmatmul.mubr.f32.gmra.mxu0 %v1089
        %v1210 = vpop.f32.mrf.mxu0
        %v1211 = vadd.f32 %v1018, %v1210
        %v1212 = vpop.f32.mrf.mxu0
        %1213 = vmatprep.mubr.f32.mxu0 0.0
        %1214 = vmatmul.mubr.f32.gmra.mxu0 %v1092
        %v1215 = vpop.f32.mrf.mxu0
        %v1216 = vadd.f32 %v1023, %v1215
        %v1217 = vpop.f32.mrf.mxu0
        %1218 = vmatprep.mubr.f32.mxu0 0.0
        %1219 = vmatmul.mubr.f32.gmra.mxu0 %v1095
        %v1220 = vpop.f32.mrf.mxu0
        %v1221 = vadd.f32 %v1028, %v1220
        %v1222 = vpop.f32.mrf.mxu0
        %1223 = vmatprep.mubr.f32.mxu0 0.0
        %1224 = vmatmul.mubr.f32.gmra.mxu0 %v1098
        %v1225 = vpop.f32.mrf.mxu0
        %v1226 = vadd.f32 %v1033, %v1225
        %v1227 = vpop.f32.mrf.mxu0
        %1228 = vmatprep.mubr.f32.mxu0 0.0
        %1229 = vmatmul.mubr.f32.gmra.mxu0 %v1101
        %v1230 = vpop.f32.mrf.mxu0
        %v1231 = vadd.f32 %v1038, %v1230
        %v1232 = vpop.f32.mrf.mxu0
        %1233 = vmatprep.mubr.f32.mxu0 0.0
        %1234 = vmatmul.mubr.f32.gmra.mxu0 %v1104
        %v1235 = vpop.f32.mrf.mxu0
        %v1236 = vadd.f32 %v1043, %v1235
        %v1237 = vpop.f32.mrf.mxu0
        %1238 = vmatprep.mubr.f32.mxu0 0.0
        %1239 = vmatmul.mubr.f32.gmra.mxu0 %v1107
        %v1240 = vpop.f32.mrf.mxu0
        %v1241 = vadd.f32 %v1048, %v1240
        %v1242 = vpop.f32.mrf.mxu0
        %1243 = vmatprep.mubr.f32.mxu0 0.0
        %1244 = vmatmul.mubr.f32.gmra.mxu0 %v1110
        %v1245 = vpop.f32.mrf.mxu0
        %v1246 = vadd.f32 %v1053, %v1245
        %v1247 = vpop.f32.mrf.mxu0
        %1248 = vmatprep.mubr.f32.mxu0 0.0
        %1249 = vmatmul.mubr.f32.gmra.mxu0 %v1113
        %v1250 = vpop.f32.mrf.mxu0
        %v1251 = vadd.f32 %v1058, %v1250
        %v1252 = vpop.f32.mrf.mxu0
        %1253 = vmatprep.mubr.f32.mxu0 0.0
        %1254 = vmatmul.mubr.f32.gmra.mxu0 %v1116
        %v1255 = vpop.f32.mrf.mxu0
        %v1256 = vadd.f32 %v1063, %v1255
        %v1257 = vpop.f32.mrf.mxu0
        %1258 = vmatprep.mubr.f32.mxu0 0.0
        %1259 = vmatmul.mubr.f32.gmra.mxu0 %v1119
        %v1260 = vpop.f32.mrf.mxu0
        %v1261 = vadd.f32 %v1068, %v1260
        %v1262 = vpop.f32.mrf.mxu0
        %1263 = vmatprep.mubr.f32.mxu0 0.0
        %1264 = vmatmul.mubr.f32.gmra.mxu0 %v1122
        %v1265 = vpop.f32.mrf.mxu0
        %v1266 = vadd.f32 %v1073, %v1265
        %v1267 = vpop.f32.mrf.mxu0
        %1268 = vdwg.mxu0
        %v1269 = vld [vmem:[%s6] sm:$0x1]
        %v1271 = vlaneseq
        %v1272 = vshrl.u32 %v1271, 7
        %v1273 = vsub.s32 0, %v1272
        %v1274 = vrot.slane %v1269, %v1273
        %v1276 = vadd.f32 %v1191, %v1274
        %v1277 = vadd.f32 %v1196, %v1274
        %v1278 = vadd.f32 %v1201, %v1274
        %v1279 = vadd.f32 %v1206, %v1274
        %v1280 = vadd.f32 %v1211, %v1274
        %v1281 = vadd.f32 %v1216, %v1274
        %v1282 = vadd.f32 %v1221, %v1274
        %v1283 = vadd.f32 %v1226, %v1274
        %v1284 = vadd.f32 %v1231, %v1274
        %v1285 = vadd.f32 %v1236, %v1274
        %v1286 = vadd.f32 %v1241, %v1274
        %v1287 = vadd.f32 %v1246, %v1274
        %v1288 = vadd.f32 %v1251, %v1274
        %v1289 = vadd.f32 %v1256, %v1274
        %v1290 = vadd.f32 %v1261, %v1274
        %v1291 = vadd.f32 %v1266, %v1274
        %v1292 = vmax.f32 %v1276, 0.0
        %v1293 = vmax.f32 %v1277, 0.0
        %v1294 = vmax.f32 %v1278, 0.0
        %v1295 = vmax.f32 %v1279, 0.0
        %v1296 = vmax.f32 %v1280, 0.0
        %v1297 = vmax.f32 %v1281, 0.0
        %v1298 = vmax.f32 %v1282, 0.0
        %v1299 = vmax.f32 %v1283, 0.0
        %v1300 = vmax.f32 %v1284, 0.0
        %v1301 = vmax.f32 %v1285, 0.0
        %v1302 = vmax.f32 %v1286, 0.0
        %v1303 = vmax.f32 %v1287, 0.0
        %v1304 = vmax.f32 %v1288, 0.0
        %v1305 = vmax.f32 %v1289, 0.0
        %v1306 = vmax.f32 %v1290, 0.0
        %v1307 = vmax.f32 %v1291, 0.0
        %v1308 = vld [vmem:[%s7] sm:$0xff]
        %v1309 = vld [vmem:[%s7 + $0x8] sm:$0xff]
        %v1310 = vld [vmem:[%s7 + $0x10] sm:$0xff]
        %v1311 = vld [vmem:[%s7 + $0x18] sm:$0xff]
        %v1312 = vld [vmem:[%s7 + $0x20] sm:$0xff]
        %v1313 = vld [vmem:[%s7 + $0x28] sm:$0xff]
        %v1314 = vld [vmem:[%s7 + $0x30] sm:$0xff]
        %v1315 = vld [vmem:[%s7 + $0x38] sm:$0xff]
        %v1316 = vld [vmem:[%s7 + $0x40] sm:$0xff]
        %v1317 = vld [vmem:[%s7 + $0x48] sm:$0xff]
        %v1318 = vld [vmem:[%s7 + $0x50] sm:$0xff]
        %v1319 = vld [vmem:[%s7 + $0x58] sm:$0xff]
        %v1320 = vld [vmem:[%s7 + $0x60] sm:$0xff]
        %v1321 = vld [vmem:[%s7 + $0x68] sm:$0xff]
        %v1322 = vld [vmem:[%s7 + $0x70] sm:$0xff]
        %v1323 = vld [vmem:[%s7 + $0x78] sm:$0xff]
        %v1324 = vld [vmem:[%s8] sm:$0x1]
        %v1326 = vlaneseq
        %v1327 = vshrl.u32 %v1326, 7
        %v1328 = vsub.s32 0, %v1327
        %v1329 = vrot.slane %v1324, %v1328
        %1331 = vmatprep.subr.mxu0 0.0
        %1332 = vmatpush1.msra.mxu0 %v1323
        %1333 = vmatprep.subr.mxu0 0.0
        %1334 = vmatpush1.msra.mxu0 %v1322
        %1335 = vmatprep.subr.mxu0 0.0
        %1336 = vmatpush1.msra.mxu0 %v1321
        %1337 = vmatprep.subr.mxu0 0.0
        %1338 = vmatpush1.msra.mxu0 %v1320
        %1339 = vmatprep.subr.mxu0 0.0
        %1340 = vmatpush1.msra.mxu0 %v1319
        %1341 = vmatprep.subr.mxu0 0.0
        %1342 = vmatpush1.msra.mxu0 %v1318
        %1343 = vmatprep.subr.mxu0 0.0
        %1344 = vmatpush1.msra.mxu0 %v1317
        %1345 = vmatprep.subr.mxu0 0.0
        %1346 = vmatpush1.msra.mxu0 %v1316
        %1347 = vmatprep.subr.mxu0 0.0
        %1348 = vmatpush1.msra.mxu0 %v1315
        %1349 = vmatprep.subr.mxu0 0.0
        %1350 = vmatpush1.msra.mxu0 %v1314
        %1351 = vmatprep.subr.mxu0 0.0
        %1352 = vmatpush1.msra.mxu0 %v1313
        %1353 = vmatprep.subr.mxu0 0.0
        %1354 = vmatpush1.msra.mxu0 %v1312
        %1355 = vmatprep.subr.mxu0 0.0
        %1356 = vmatpush1.msra.mxu0 %v1311
        %1357 = vmatprep.subr.mxu0 0.0
        %1358 = vmatpush1.msra.mxu0 %v1310
        %1359 = vmatprep.subr.mxu0 0.0
        %1360 = vmatpush1.msra.mxu0 %v1309
        %1361 = vmatprep.subr.mxu0 0.0
        %1362 = vmatpush1.msra.mxu0 %v1308
        %1363 = vmatprep.subr.mxu0 0.0
        %1364 = vmatpush2.msra.mxu0 0.0
        %1365 = vmatprep.subr.mxu0 0.0
        %1366 = vmatpush2.msra.mxu0 0.0
        %1367 = vmatprep.subr.mxu0 0.0
        %1368 = vmatpush2.msra.mxu0 0.0
        %1369 = vmatprep.subr.mxu0 0.0
        %1370 = vmatpush2.msra.mxu0 0.0
        %1371 = vmatprep.subr.mxu0 0.0
        %1372 = vmatpush2.msra.mxu0 0.0
        %1373 = vmatprep.subr.mxu0 0.0
        %1374 = vmatpush2.msra.mxu0 0.0
        %1375 = vmatprep.subr.mxu0 0.0
        %1376 = vmatpush2.msra.mxu0 0.0
        %1377 = vmatprep.subr.mxu0 0.0
        %1378 = vmatpush2.msra.mxu0 0.0
        %1379 = vmatprep.subr.mxu0 0.0
        %1380 = vmatpush2.msra.mxu0 0.0
        %1381 = vmatprep.subr.mxu0 0.0
        %1382 = vmatpush2.msra.mxu0 0.0
        %1383 = vmatprep.subr.mxu0 0.0
        %1384 = vmatpush2.msra.mxu0 0.0
        %1385 = vmatprep.subr.mxu0 0.0
        %1386 = vmatpush2.msra.mxu0 0.0
        %1387 = vmatprep.subr.mxu0 0.0
        %1388 = vmatpush2.msra.mxu0 0.0
        %1389 = vmatprep.subr.mxu0 0.0
        %1390 = vmatpush2.msra.mxu0 0.0
        %1391 = vmatprep.subr.mxu0 0.0
        %1392 = vmatpush2.msra.mxu0 0.0
        %1393 = vmatprep.subr.mxu0 0.0
        %1394 = vmatpush2.msra.mxu0 0.0
        %1395 = vmatprep.mubr.f32.mxu0 0.0
        %1396 = vmatmul.mubr.f32.gmra.mxu0 %v1292
        %v1397 = vpop.f32.mrf.mxu0
        %v1398 = vadd.f32 %v1329, %v1397
        %v1399 = vpop.f32.mrf.mxu0
        %1400 = vmatprep.mubr.f32.mxu0 0.0
        %1401 = vmatmul.mubr.f32.gmra.mxu0 %v1293
        %v1402 = vpop.f32.mrf.mxu0
        %v1403 = vadd.f32 %v1329, %v1402
        %v1404 = vpop.f32.mrf.mxu0
        %1405 = vmatprep.mubr.f32.mxu0 0.0
        %1406 = vmatmul.mubr.f32.gmra.mxu0 %v1294
        %v1407 = vpop.f32.mrf.mxu0
        %v1408 = vadd.f32 %v1329, %v1407
        %v1409 = vpop.f32.mrf.mxu0
        %1410 = vmatprep.mubr.f32.mxu0 0.0
        %1411 = vmatmul.mubr.f32.gmra.mxu0 %v1295
        %v1412 = vpop.f32.mrf.mxu0
        %v1413 = vadd.f32 %v1329, %v1412
        %v1414 = vpop.f32.mrf.mxu0
        %1415 = vmatprep.mubr.f32.mxu0 0.0
        %1416 = vmatmul.mubr.f32.gmra.mxu0 %v1296
        %v1417 = vpop.f32.mrf.mxu0
        %v1418 = vadd.f32 %v1329, %v1417
        %v1419 = vpop.f32.mrf.mxu0
        %1420 = vmatprep.mubr.f32.mxu0 0.0
        %1421 = vmatmul.mubr.f32.gmra.mxu0 %v1297
        %v1422 = vpop.f32.mrf.mxu0
        %v1423 = vadd.f32 %v1329, %v1422
        %v1424 = vpop.f32.mrf.mxu0
        %1425 = vmatprep.mubr.f32.mxu0 0.0
        %1426 = vmatmul.mubr.f32.gmra.mxu0 %v1298
        %v1427 = vpop.f32.mrf.mxu0
        %v1428 = vadd.f32 %v1329, %v1427
        %v1429 = vpop.f32.mrf.mxu0
        %1430 = vmatprep.mubr.f32.mxu0 0.0
        %1431 = vmatmul.mubr.f32.gmra.mxu0 %v1299
        %v1432 = vpop.f32.mrf.mxu0
        %v1433 = vadd.f32 %v1329, %v1432
        %v1434 = vpop.f32.mrf.mxu0
        %1435 = vmatprep.mubr.f32.mxu0 0.0
        %1436 = vmatmul.mubr.f32.gmra.mxu0 %v1300
        %v1437 = vpop.f32.mrf.mxu0
        %v1438 = vadd.f32 %v1329, %v1437
        %v1439 = vpop.f32.mrf.mxu0
        %1440 = vmatprep.mubr.f32.mxu0 0.0
        %1441 = vmatmul.mubr.f32.gmra.mxu0 %v1301
        %v1442 = vpop.f32.mrf.mxu0
        %v1443 = vadd.f32 %v1329, %v1442
        %v1444 = vpop.f32.mrf.mxu0
        %1445 = vmatprep.mubr.f32.mxu0 0.0
        %1446 = vmatmul.mubr.f32.gmra.mxu0 %v1302
        %v1447 = vpop.f32.mrf.mxu0
        %v1448 = vadd.f32 %v1329, %v1447
        %v1449 = vpop.f32.mrf.mxu0
        %1450 = vmatprep.mubr.f32.mxu0 0.0
        %1451 = vmatmul.mubr.f32.gmra.mxu0 %v1303
        %v1452 = vpop.f32.mrf.mxu0
        %v1453 = vadd.f32 %v1329, %v1452
        %v1454 = vpop.f32.mrf.mxu0
        %1455 = vmatprep.mubr.f32.mxu0 0.0
        %1456 = vmatmul.mubr.f32.gmra.mxu0 %v1304
        %v1457 = vpop.f32.mrf.mxu0
        %v1458 = vadd.f32 %v1329, %v1457
        %v1459 = vpop.f32.mrf.mxu0
        %1460 = vmatprep.mubr.f32.mxu0 0.0
        %1461 = vmatmul.mubr.f32.gmra.mxu0 %v1305
        %v1462 = vpop.f32.mrf.mxu0
        %v1463 = vadd.f32 %v1329, %v1462
        %v1464 = vpop.f32.mrf.mxu0
        %1465 = vmatprep.mubr.f32.mxu0 0.0
        %1466 = vmatmul.mubr.f32.gmra.mxu0 %v1306
        %v1467 = vpop.f32.mrf.mxu0
        %v1468 = vadd.f32 %v1329, %v1467
        %v1469 = vpop.f32.mrf.mxu0
        %1470 = vmatprep.mubr.f32.mxu0 0.0
        %1471 = vmatmul.mubr.f32.gmra.mxu0 %v1307
        %v1472 = vpop.f32.mrf.mxu0
        %v1473 = vadd.f32 %v1329, %v1472
        %v1474 = vpop.f32.mrf.mxu0
        %1475 = vdwg.mxu0
        %v1476 = vmax.f32 %v1398, 0.0
        %v1477 = vmax.f32 %v1403, 0.0
        %v1478 = vmax.f32 %v1408, 0.0
        %v1479 = vmax.f32 %v1413, 0.0
        %v1480 = vmax.f32 %v1418, 0.0
        %v1481 = vmax.f32 %v1423, 0.0
        %v1482 = vmax.f32 %v1428, 0.0
        %v1483 = vmax.f32 %v1433, 0.0
        %v1484 = vmax.f32 %v1438, 0.0
        %v1485 = vmax.f32 %v1443, 0.0
        %v1486 = vmax.f32 %v1448, 0.0
        %v1487 = vmax.f32 %v1453, 0.0
        %v1488 = vmax.f32 %v1458, 0.0
        %v1489 = vmax.f32 %v1463, 0.0
        %v1490 = vmax.f32 %v1468, 0.0
        %v1491 = vmax.f32 %v1473, 0.0
        %v1492 = vld [vmem:[%s9] sm:$0x3]
        %v1493 = vld [vmem:[%s10] sm:$0x3]
        %1495 = vset.pattern.permute.xlu0 0
        %1496 = vperm.xlu0 %1495, %v1493
        %v1497 = vpop.permute.xlu0 %1496
        %1499 = vmatprep.subr.mxu0 0.0
        %1500 = vmatpush1.xpose.msra.mxu0 %v1491
        %1501 = vmatprep.subr.mxu0 0.0
        %1502 = vmatpush1.xpose.msra.mxu0 %v1490
        %1503 = vmatprep.subr.mxu0 0.0
        %1504 = vmatpush1.xpose.msra.mxu0 %v1489
        %1505 = vmatprep.subr.mxu0 0.0
        %1506 = vmatpush1.xpose.msra.mxu0 %v1488
        %1507 = vmatprep.subr.mxu0 0.0
        %1508 = vmatpush1.xpose.msra.mxu0 %v1487
        %1509 = vmatprep.subr.mxu0 0.0
        %1510 = vmatpush1.xpose.msra.mxu0 %v1486
        %1511 = vmatprep.subr.mxu0 0.0
        %1512 = vmatpush1.xpose.msra.mxu0 %v1485
        %1513 = vmatprep.subr.mxu0 0.0
        %1514 = vmatpush1.xpose.msra.mxu0 %v1484
        %1515 = vmatprep.subr.mxu0 0.0
        %1516 = vmatpush1.xpose.msra.mxu0 %v1483
        %1517 = vmatprep.subr.mxu0 0.0
        %1518 = vmatpush1.xpose.msra.mxu0 %v1482
        %1519 = vmatprep.subr.mxu0 0.0
        %1520 = vmatpush1.xpose.msra.mxu0 %v1481
        %1521 = vmatprep.subr.mxu0 0.0
        %1522 = vmatpush1.xpose.msra.mxu0 %v1480
        %1523 = vmatprep.subr.mxu0 0.0
        %1524 = vmatpush1.xpose.msra.mxu0 %v1479
        %1525 = vmatprep.subr.mxu0 0.0
        %1526 = vmatpush1.xpose.msra.mxu0 %v1478
        %1527 = vmatprep.subr.mxu0 0.0
        %1528 = vmatpush1.xpose.msra.mxu0 %v1477
        %1529 = vmatprep.subr.mxu0 0.0
        %1530 = vmatpush1.xpose.msra.mxu0 %v1476
        %1531 = vmatprep.subr.mxu0 0.0
        %1532 = vmatpush2.xpose.msra.mxu0 0.0
        %1533 = vmatprep.subr.mxu0 0.0
        %1534 = vmatpush2.xpose.msra.mxu0 0.0
        %1535 = vmatprep.subr.mxu0 0.0
        %1536 = vmatpush2.xpose.msra.mxu0 0.0
        %1537 = vmatprep.subr.mxu0 0.0
        %1538 = vmatpush2.xpose.msra.mxu0 0.0
        %1539 = vmatprep.subr.mxu0 0.0
        %1540 = vmatpush2.xpose.msra.mxu0 0.0
        %1541 = vmatprep.subr.mxu0 0.0
        %1542 = vmatpush2.xpose.msra.mxu0 0.0
        %1543 = vmatprep.subr.mxu0 0.0
        %1544 = vmatpush2.xpose.msra.mxu0 0.0
        %1545 = vmatprep.subr.mxu0 0.0
        %1546 = vmatpush2.xpose.msra.mxu0 0.0
        %1547 = vmatprep.subr.mxu0 0.0
        %1548 = vmatpush2.xpose.msra.mxu0 0.0
        %1549 = vmatprep.subr.mxu0 0.0
        %1550 = vmatpush2.xpose.msra.mxu0 0.0
        %1551 = vmatprep.subr.mxu0 0.0
        %1552 = vmatpush2.xpose.msra.mxu0 0.0
        %1553 = vmatprep.subr.mxu0 0.0
        %1554 = vmatpush2.xpose.msra.mxu0 0.0
        %1555 = vmatprep.subr.mxu0 0.0
        %1556 = vmatpush2.xpose.msra.mxu0 0.0
        %1557 = vmatprep.subr.mxu0 0.0
        %1558 = vmatpush2.xpose.msra.mxu0 0.0
        %1559 = vmatprep.subr.mxu0 0.0
        %1560 = vmatpush2.xpose.msra.mxu0 0.0
        %1561 = vmatprep.subr.mxu0 0.0
        %1562 = vmatpush2.xpose.msra.mxu0 0.0
        %1563 = vmatprep.mubr.f32.mxu0 0.0
        %1564 = vmatmul.mubr.f32.gmra.mxu0 %v1492
        %v1565 = vpop.f32.mrf.mxu0
        %v1566 = vadd.f32 %v1497, %v1565
        %v1567 = vpop.f32.mrf.mxu0
        %1568 = vdwg.mxu0
        %1569 = vst [vmem:[%s396] sm:$0x3] %v1566
        %s1570 = sand.u32 %s274, 1
        %s1571 = scalar_lea.sflag [#allocation3], %s1570
        %s1572 = sand.u32 %s274, 1
        %s1573 = smul.addr %s1572, 2
        %s1574 = scalar_lea.vmem [#allocation2], %s1573
        // Predicated region
        $region65: #{tpu_custom_call.1} parent=63 // pred_check
          %p1575 = pneg %p284
        $region66: #{tpu_custom_call.1} parent=63 // pred_check_branch
          %1577 = sbr.rel (%p1575) target = $region68
        $region67: #{tpu_custom_call.1} parent=63 // pred_region
          %s1579 = ssub.s32 32, 32
          %1580 = vsyncadd %s1571, %s1579
          %s1581 = smul.addr %s25, 32
          %s1582 = scalar_lea.hbm %s11, %s1581
          %s1584 = sshll.u32 %s1574, 4
          %s1585 = int_to_ptr.vmem [resolvable:$true] %s1584
          %1587 = dma.vmem_to_hbm [thread:$0]  %s1585, 32, %s1582, %s1571
        $region68: #{tpu_custom_call.1} parent=63 // pred_fallthru
          _
      $region64: #{tpu_custom_call.1} parent=5 // pred_fallthru
        _
      %p1588 = scmp.le.s32.totalorder 2, %s20
      // Predicated region
      $region69: #{tpu_custom_call.1} parent=5 // pred_check
        %p1589 = pneg %p1588
      $region70: #{tpu_custom_call.1} parent=5 // pred_check_branch
        %1591 = sbr.rel (%p1589) target = $region72
      $region71: #{tpu_custom_call.1} parent=5 // pred_region
        %s1592 = ssub.s32 %s20, 2
        // Predicated region
        $region73: #{tpu_custom_call.1} parent=71 // pred_check
          %p1593 = pneg %p290
        $region74: #{tpu_custom_call.1} parent=71 // pred_check_branch
          %1595 = sbr.rel (%p1593) target = $region76
        $region75: #{tpu_custom_call.1} parent=71 // pred_region
          %s1596 = sand.u32 %s275, 1
          %s1597 = scalar_lea.sflag [#allocation3], %s1596
          %s1598 = sand.u32 %s275, 1
          %s1599 = smul.addr %s1598, 2
          %s1600 = scalar_lea.vmem [#allocation2], %s1599
          %1601 = dma.done %s1597, 32
        $region76: #{tpu_custom_call.1} parent=71 // pred_fallthru
          _
      $region72: #{tpu_custom_call.1} parent=5 // pred_fallthru
        _
    $region6: #{tpu_custom_call.1} parent=1 // loop_footer
      %s24 = sadd.s32 1, %s20
    $region7: #{tpu_custom_call.1} parent=1 // loop_footer_branch
      %19 = sbr.rel target = $region3
    $region8: #{tpu_custom_call.1} parent=1 // loop_exit
      _
    %1602 = vsyncpa [#allocation3], 1
    %s1603 = scalar_lea.sflag [#allocation3], 1
    %1604 = vsyncpa %s1603, 1

</llo_original>
